<compile_context>
chip_gen: v7x
topology: tpu7x:2x2x1
jax: 0.10.0
libtpu: 0.0.40
codegen_flags: <defaults>
</compile_context>

<pallas_src>
import jax
import jax.numpy as jnp
from jax.experimental import pallas as pl
from jax.experimental.pallas import tpu as pltpu


# ------------------------- Pallas kernel -------------------------

def _transpose_tile_kernel(x_ref, o_ref):
    # Batch dim is squeezed out by the BlockSpec:
    #   x_ref: (tS, tD)  ->  o_ref: (tD, tS)
    # Plain 2-D transpose lowers to the XLU vxpose path (vector-extended slot),
    # leaving the kernel HBM-bound as intended.
    o_ref[...] = x_ref[...].T


# Byte budget per pipeline tile buffer (input tile bytes == output tile bytes).
# Double-buffered input + output => pipeline VMEM <= 4 * budget = 16 MiB:
# fits v6e/v7x scoped defaults (32 MiB) and v5e once the limit is raised.
_TILE_BYTE_BUDGET = 4 << 20
_VMEM_LIMIT_BYTES = 32 << 20          # explicit raise; v5e default is 16 MiB
_SMALL_FALLBACK_BYTES = 1 << 20       # below this, launch overhead dominates


def _fit_tile(axis_len, max_elems):
    """Largest legal tile edge for an axis of length `axis_len` under an
    element budget: the full axis if it fits, else the largest multiple of
    128 (keeps both the load and the transposed store lane-dense)."""
    if axis_len <= max_elems:
        return axis_len
    return max((max_elems // 128) * 128, 128)


def _choose_tiles(S, D, itemsize):
    """Dtype-aware, byte-budget-driven (tS, tD) selection.

    * Whole (S, D) slab if it fits the budget -> grid (B, 1, 1), one
      contiguous HBM slab per output tile.
    * Otherwise take the smaller axis in full when that still leaves >= 512
      elements of budget for the other axis (PatchTST d_model=128 -> tD=128,
      tS up to 8192), then fill the remaining budget with the larger axis.
    """
    budget = max(_TILE_BYTE_BUDGET // itemsize, 128 * 256)
    if S * D <= budget:
        return S, D

    def _small_big(small, big):
        if small * 512 <= budget:
            t_small = small                                   # full small axis
        else:
            t_small = max((budget // 512) // 128 * 128, 128)  # keep big >= 512
        t_big = _fit_tile(big, budget // t_small)
        return t_small, t_big

    if D <= S:
        tD, tS = _small_big(D, S)
    else:
        tS, tD = _small_big(S, D)
    return tS, tD


def _pallas_transpose_12(x, tile_override=None):
    """Swap axes 1 and 2 of a 3-D array [B, S, D] -> [B, D, S] with Pallas."""
    B, S, D = x.shape
    itemsize = jnp.dtype(x.dtype).itemsize
    if tile_override is None:
        tS, tD = _choose_tiles(S, D, itemsize)
    else:
        tS, tD = tile_override
    grid = (B, pl.cdiv(S, tS), pl.cdiv(D, tD))

    return pl.pallas_call(
        _transpose_tile_kernel,
        out_shape=jax.ShapeDtypeStruct((B, D, S), x.dtype),
        grid_spec=pltpu.PrefetchScalarGridSpec(
            num_scalar_prefetch=0,
            grid=grid,
            # Input tile (b, i, j): rows [i*tS, ...) x cols [j*tD, ...).
            in_specs=[pl.BlockSpec((pl.Squeezed(), tS, tD),
                                   lambda b, i, j: (b, i, j))],
            # Output tile is the transposed block: block index (b, j, i).
            # Ragged edges are handled by Pallas boundary masking: transposed
            # input padding lands only in the dropped output padding region.
            out_specs=pl.BlockSpec((pl.Squeezed(), tD, tS),
                                   lambda b, i, j: (b, j, i)),
        ),
        compiler_params=pltpu.CompilerParams(
            # Pure data movement; every grid point is independent, so all
            # three axes can shard across v7x's two TensorCores.
            dimension_semantics=("parallel", "parallel", "parallel"),
            vmem_limit_bytes=_VMEM_LIMIT_BYTES,
        ),
        # Pure-bandwidth custom call: lets XLA's scheduler overlap neighbors.
        cost_estimate=pl.CostEstimate(
            flops=0, transcendentals=0,
            bytes_accessed=2 * x.size * itemsize),
    )(x)


class Transpose:
    """JAX/Pallas equivalent of the PyTorch `Transpose` module.

    PatchTST usage (swap dims 1 and 2 of a 3-D tensor) goes through the Pallas
    kernel; `contiguous` is a no-op in JAX (results are fresh arrays).
    """

    def __init__(self, *dims, contiguous=False):
        assert len(dims) == 2, "Transpose expects exactly two dims"
        self.dims = dims
        self.contiguous = contiguous  # no-op in JAX

    def __call__(self, x):
        d0, d1 = sorted(d % x.ndim for d in self.dims)
        if d0 == d1:
            return x
        if x.ndim == 3 and (d0, d1) == (1, 2):
            _, S, D = x.shape
            itemsize = jnp.dtype(x.dtype).itemsize
            big_enough = x.size * itemsize >= _SMALL_FALLBACK_BYTES
            aligned = S >= 128 and D >= 128
            # Sub-32-bit dtypes: keep packed-sublane edge cases (axes that are
            # not multiples of 8) on the XLA path.
            packed_ok = itemsize >= 4 or (S % 8 == 0 and D % 8 == 0)
            if big_enough and aligned and packed_ok:
                return _pallas_transpose_12(x)
        # TODO(synk): general N-d / arbitrary-dim transpose falls back to plain
        # JAX (small tensors and <128 axes are better served by XLA fusion).
        return jnp.swapaxes(x, d0, d1)


if __name__ == "__main__":
    key = jax.random.PRNGKey(0)
    k1, k2, k3, k4, k5 = jax.random.split(key, 5)
    module = Transpose(1, 2, contiguous=True)

    # 1) Small PatchTST-like shape [batch, seq_len, d_model] -> fallback path.
    x_small = jax.random.normal(k1, (2, 16, 32), dtype=jnp.float32)
    out_small = jax.block_until_ready(module(x_small))
    assert out_small.shape == (2, 32, 16)
    assert jnp.array_equal(out_small, jnp.swapaxes(x_small, 1, 2))

    # 2) f32: whole (640, 512) slab fits the 4 MiB tile budget -> grid
    #    (2, 1, 1), no ragged tiles, one contiguous HBM slab per output block.
    assert _choose_tiles(640, 512, 4) == (640, 512)
    x_big = jax.random.normal(k2, (2, 640, 512), dtype=jnp.float32)
    out_big = jax.block_until_ready(module(x_big))
    assert out_big.shape == (2, 512, 640)
    assert out_big.dtype == x_big.dtype
    assert jnp.array_equal(out_big, jnp.swapaxes(x_big, 1, 2))

    # 3) bf16 direct kernel call: dtype-aware budget (2M elements) takes the
    #    whole slab, no ragged split.
    x_bf16 = jax.random.normal(k3, (2, 256, 600), dtype=jnp.bfloat16)
    out_bf16 = jax.block_until_ready(_pallas_transpose_12(x_bf16))
    assert out_bf16.shape == (2, 600, 256)
    assert out_bf16.dtype == jnp.bfloat16
    assert jnp.array_equal(out_bf16, jnp.swapaxes(x_bf16, 1, 2))

    # 4) Budget-driven split with ragged S tail: (1408, 1024) f32 exceeds the
    #    budget -> tD = 1024 (full axis), tS = 1024 (+384 masked tail).
    assert _choose_tiles(1408, 1024, 4) == (1024, 1024)
    x_split = jax.random.normal(k4, (1, 1408, 1024), dtype=jnp.float32)
    out_split = jax.block_until_ready(module(x_split))
    assert out_split.shape == (1, 1024, 1408)
    assert jnp.array_equal(out_split, jnp.swapaxes(x_split, 1, 2))

    # 5) Doubly-ragged corner block (both S and D tails masked in the same
    #    tile), forced via an explicit tile override.
    x_rag = jax.random.normal(k5, (1, 320, 200), dtype=jnp.float32)
    out_rag = jax.block_until_ready(
        _pallas_transpose_12(x_rag, tile_override=(256, 128)))
    assert out_rag.shape == (1, 200, 320)
    assert jnp.array_equal(out_rag, jnp.swapaxes(x_rag, 1, 2))

    print("KERNEL_OK")
</pallas_src>

<mosaic_0001>
module attributes {stable_mosaic.version = 11 : i64} {
  func.func @_transpose_tile_kernel(%arg0: i32, %arg1: i32, %arg2: i32, %arg3: memref<1x640x512xf32, #tpu.memory_space<vmem>>, %arg4: memref<1x512x640xf32, #tpu.memory_space<vmem>>) attributes {dimension_semantics = [#tpu.dimension_semantics<parallel>, #tpu.dimension_semantics<parallel>, #tpu.dimension_semantics<parallel>], iteration_bounds = array<i64: 2, 1, 1>, scalar_prefetch = 0 : i64, scratch_operands = 0 : i64, tpu.core_type = #tpu.core_type<tc>, window_params = [{transform_indices = @transform_0, window_bounds = array<i64: 1, 640, 512>}, {transform_indices = @transform_1, window_bounds = array<i64: 1, 512, 640>}]} {
    %c0 = arith.constant 0 : index
    %c0_0 = arith.constant 0 : index
    %c0_1 = arith.constant 0 : index
    %0 = vector.load %arg3[%c0, %c0_0, %c0_1] : memref<1x640x512xf32, #tpu.memory_space<vmem>>, vector<1x640x512xf32>
    %1 = vector.shape_cast %0 : vector<1x640x512xf32> to vector<640x512xf32>
    %2 = tpu.transpose %1, [1, 0] : vector<640x512xf32> -> vector<512x640xf32>
    %c0_2 = arith.constant 0 : index
    %c0_3 = arith.constant 0 : index
    %c0_4 = arith.constant 0 : index
    %3 = vector.load %arg4[%c0_2, %c0_3, %c0_4] : memref<1x512x640xf32, #tpu.memory_space<vmem>>, vector<1x512x640xf32>
    %4 = vector.shape_cast %3 : vector<1x512x640xf32> to vector<512x640xf32>
    %5 = vector.shape_cast %2 : vector<512x640xf32> to vector<1x512x640xf32>
    tpu.vector_store %arg4[%c0_2, %c0_3, %c0_4], %5 {strides = array<i32>} : memref<1x512x640xf32, #tpu.memory_space<vmem>>, vector<1x512x640xf32>,
    return
  }
  func.func @transform_0(%arg0: i32, %arg1: i32, %arg2: i32) -> (i32, i32, i32) {
    %c0_i32 = arith.constant 0 : i32
    return %arg0, %arg1, %arg2 : i32, i32, i32
  }
  func.func @transform_1(%arg0: i32, %arg1: i32, %arg2: i32) -> (i32, i32, i32) {
    %c0_i32 = arith.constant 0 : i32
    return %arg0, %arg2, %arg1 : i32, i32, i32
  }
}

</mosaic_0001>

<llo_original>
// kernel: tpu_custom_call.1
$region0: #{tpu_custom_call.1}
  #allocation0 [shape = 'u32[]', space=smem, size = 0x4, offset = 0x4, fixed_abs, tag = 'smem constant byte address 0x4 - core index']
  #allocation1 [shape = 'u32[144,128]{1,0:T(1,128)}', space=vmem, size = 0x12000, scoped, tag = 'internal scratch']
  %s0 = inlined_call_operand.hbm [shape: f32[2,640,512], index: 0, kind: input, shape index: {}]
  %s1 = inlined_call_operand.hbm [shape: f32[2,512,640], index: 1, kind: output, shape index: {}]
  %s2 = sld [smem:[#allocation0]]
  $region41: #{tpu_custom_call.1} parent=0
    _
  %s4 = ssub.s32 1, %s2
  %s5 = scalar_select 0, %s4, %s2
  $region1: #{tpu_custom_call.1} parent=0
    #allocation2 [shape = 'u8[2621440]{0}', space=vmem, size = 0x280000, scoped, tag = 'input window, operand 0']
    #allocation3 [shape = 's32[2]{0}', space=sflag, size = 0x8, scoped, tag = 'scoped memory for tpu_custom_call.1']
    #allocation4 [shape = 's32[2]{0}', space=sflag, size = 0x8, scoped, tag = 'scoped memory for tpu_custom_call.1']
    #allocation5 [shape = 'u8[2621440]{0}', space=vmem, size = 0x280000, scoped, tag = 'output window, operand 0']
    %6 = vsyncpa [#allocation3], 0
    %s7 = scalar_lea.sflag [#allocation3], 1
    %8 = vsyncpa %s7, 0
    %9 = vsyncpa [#allocation4], 0
    %s10 = scalar_lea.sflag [#allocation4], 1
    %11 = vsyncpa %s10, 0
    loop: start=0, step=1, limit=4
    $region2: #{tpu_custom_call.1} parent=1 // loop_pre_header
      _
    $region3: #{tpu_custom_call.1} parent=1 // loop_header
      %s13 = sphi 0, %s17
      %p14 = scmp.ge.s32.totalorder %s13, 4
      %s20 = sphi 0, %s39
      %s21 = sphi 0, %s35
      %s22 = sphi 0, %s31
      %s23 = sphi 0, %s20
      %s24 = sphi 0, %s21
      %s25 = sphi 0, %s22
      %s26 = sphi 0, %s23
      %s27 = sphi 0, %s24
      %s28 = sphi 0, %s25
      %s46 = sphi 0, %s48
      %s49 = sphi 0, %s46
      %s50 = sphi 0, %s49
      %s66 = sphi 0, %s50
      %s76 = sphi 0, %s78
      %s79 = sphi 0, %s76
      %s80 = sphi 0, %s79
      %s96 = sphi 0, %s80
    $region4: #{tpu_custom_call.1} parent=1 // loop_header_branch
      %16 = sbr.rel (%p14) target = $region8
    $region5: #{tpu_custom_call.1} parent=1 // loop_body
      %s18 = ssub.s32 %s13, 1
      %s19 = ssub.s32 %s13, 2
      %s29 = sadd.s32 1, %s22
      %p30 = scmp.ge.s32.totalorder %s29, 1
      %s31 = scalar_select %p30, 0, %s29
      %s32 = sadd.s32 1, %s21
      %s33 = scalar_select %p30, %s32, %s21
      %p34 = scmp.ge.s32.totalorder %s33, 1
      %s35 = scalar_select %p34, 0, %s33
      %s36 = sadd.s32 1, %s20
      %s37 = scalar_select %p34, %s36, %s20
      %p38 = scmp.ge.s32.totalorder %s37, 2
      %s39 = scalar_select %p38, 0, %s37
      %s40 = ssub.s32 %s20, %s39
      %s41 = ssub.s32 %s21, %s35
      %s42 = sor.u32 %s40, %s41
      %s43 = ssub.s32 %s22, %s31
      %s44 = sor.u32 %s42, %s43
      %p45 = scmp.eq.s32.totalorder %s44, 0
      %s47 = sadd.s32 %s46, 1
      %s48 = scalar_select %p45, %s46, %s47
      %p51 = pneg %p45
      %p52 = scmp.eq.s32.totalorder %s13, 1
      %p53 = por %p51, %p52
      %p54 = scmp.ne.s32.totalorder %s46, %s49
      %p55 = scmp.eq.s32.totalorder %s13, 0
      %p56 = por %p54, %p55
      %p57 = scmp.ne.s32.totalorder %s46, %s49
      %p58 = scmp.eq.s32.totalorder %s18, 1
      %p59 = por %p57, %p58
      %p60 = scmp.ne.s32.totalorder %s49, %s50
      %p61 = scmp.eq.s32.totalorder %s18, 0
      %p62 = por %p60, %p61
      %p63 = scmp.ne.s32.totalorder %s49, %s50
      %p64 = scmp.eq.s32.totalorder %s19, 1
      %p65 = por %p63, %p64
      %p67 = scmp.ne.s32.totalorder %s50, %s66
      %p68 = scmp.eq.s32.totalorder %s19, 0
      %p69 = por %p67, %p68
      %s70 = ssub.s32 %s20, %s39
      %s71 = ssub.s32 %s22, %s31
      %s72 = sor.u32 %s70, %s71
      %s73 = ssub.s32 %s21, %s35
      %s74 = sor.u32 %s72, %s73
      %p75 = scmp.eq.s32.totalorder %s74, 0
      %s77 = sadd.s32 %s76, 1
      %s78 = scalar_select %p75, %s76, %s77
      %p81 = pneg %p75
      %p82 = scmp.eq.s32.totalorder %s13, 1
      %p83 = por %p81, %p82
      %p84 = scmp.ne.s32.totalorder %s76, %s79
      %p85 = scmp.eq.s32.totalorder %s13, 0
      %p86 = por %p84, %p85
      %p87 = scmp.ne.s32.totalorder %s76, %s79
      %p88 = scmp.eq.s32.totalorder %s18, 1
      %p89 = por %p87, %p88
      %p90 = scmp.ne.s32.totalorder %s79, %s80
      %p91 = scmp.eq.s32.totalorder %s18, 0
      %p92 = por %p90, %p91
      %p93 = scmp.ne.s32.totalorder %s79, %s80
      %p94 = scmp.eq.s32.totalorder %s19, 1
      %p95 = por %p93, %p94
      %p97 = scmp.ne.s32.totalorder %s80, %s96
      %p98 = scmp.eq.s32.totalorder %s19, 0
      %p99 = por %p97, %p98
      %p100 = scmp.le.s32.totalorder 1, %s13
      %p101 = scmp.lt.s32.totalorder %s13, 3
      %p102 = pnand %p100, %p101
      %p103 = pneg %p102
      // Predicated region
      $region9: #{tpu_custom_call.1} parent=5 // pred_check
        _
      $region10: #{tpu_custom_call.1} parent=5 // pred_check_branch
        %105 = sbr.rel (%p102) target = $region12
      $region11: #{tpu_custom_call.1} parent=5 // pred_region
        %s106 = ssub.s32 %s13, 1
      $region12: #{tpu_custom_call.1} parent=5 // pred_fallthru
        _
      %p107 = scmp.lt.s32.totalorder %s13, 2
      // Predicated region
      $region13: #{tpu_custom_call.1} parent=5 // pred_check
        %p108 = pneg %p107
      $region14: #{tpu_custom_call.1} parent=5 // pred_check_branch
        %110 = sbr.rel (%p108) target = $region16
      $region15: #{tpu_custom_call.1} parent=5 // pred_region
        // Predicated region
        $region17: #{tpu_custom_call.1} parent=15 // pred_check
          %p111 = pneg %p56
        $region18: #{tpu_custom_call.1} parent=15 // pred_check_branch
          %113 = sbr.rel (%p111) target = $region20
        $region19: #{tpu_custom_call.1} parent=15 // pred_region
          %s114 = sand.u32 %s46, 1
          %s115 = scalar_lea.sflag [#allocation3], %s114
          %s116 = sand.u32 %s46, 1
          %s117 = smul.addr %s116, 2560
          %s118 = scalar_lea.vmem [#allocation2], %s117
          %s119 = smul.u32 80, %s21
          %s120 = smul.u32 4, %s22
          %s122 = ssub.s32 40960, 40960
          %123 = vsyncadd %s115, %s122
          %s124 = smul.addr %s119, 4
          %s125 = sadd.s32 %s120, %s124
          %s126 = smul.addr %s20, 320
          %s127 = sadd.s32 %s125, %s126
          %s128 = smul.addr %s127, 128
          %s129 = scalar_lea.hbm %s0, %s128
          %s130 = sshll.u32 %s118, 4
          %s131 = int_to_ptr.vmem [resolvable:$true] %s130
          %136 = dma.hbm_to_vmem [thread:$0]  %s129, 40960, %s131, %s115, 512, 512, 32
        $region20: #{tpu_custom_call.1} parent=15 // pred_fallthru
          _
      $region16: #{tpu_custom_call.1} parent=5 // pred_fallthru
        _
      %p137 = scmp.le.s32.totalorder 1, %s13
      %p138 = scmp.lt.s32.totalorder %s13, 3
      %p139 = pnand %p137, %p138
      %p140 = pneg %p139
      // Predicated region
      $region21: #{tpu_custom_call.1} parent=5 // pred_check
        _
      $region22: #{tpu_custom_call.1} parent=5 // pred_check_branch
        %142 = sbr.rel (%p139) target = $region24
      $region23: #{tpu_custom_call.1} parent=5 // pred_region
        %s143 = ssub.s32 %s13, 1
        %s144 = sand.u32 %s49, 1
        %s145 = scalar_lea.sflag [#allocation3], %s144
        %s146 = sand.u32 %s49, 1
        %s147 = smul.addr %s146, 2560
        %s148 = scalar_lea.vmem [#allocation2], %s147
        // Predicated region
        $region25: #{tpu_custom_call.1} parent=23 // pred_check
          %p149 = pneg %p62
        $region26: #{tpu_custom_call.1} parent=23 // pred_check_branch
          %151 = sbr.rel (%p149) target = $region28
        $region27: #{tpu_custom_call.1} parent=23 // pred_region
          %152 = dma.done %s145, 40960
        $region28: #{tpu_custom_call.1} parent=23 // pred_fallthru
          _
        %s153 = sand.u32 %s49, 1
        %s154 = scalar_lea.sflag [#allocation3], %s153
        %s155 = sand.u32 %s49, 1
        %s156 = smul.addr %s155, 2560
        %s157 = scalar_lea.vmem [#allocation2], %s156
        %p158 = pneg %p62
        %p159 = pneg %p59
        %p160 = pneg %p92
        %p161 = pneg %p89
        %s162 = sand.u32 %s79, 1
        %s163 = scalar_lea.sflag [#allocation4], %s162
        %s164 = sand.u32 %s79, 1
        %s165 = smul.addr %s164, 2560
        %s166 = scalar_lea.vmem [#allocation5], %s165
        %s167 = smul.u32 80, %s24
        %s168 = smul.u32 4, %s25
        %s169 = smul.u32 64, %s25
        %s170 = smul.u32 5, %s24
        %v171 = vld [vmem:[%s148] sm:$0xff]
        %v172 = vld [vmem:[%s148 + $0x8] sm:$0xff]
        %v173 = vld [vmem:[%s148 + $0x10] sm:$0xff]
        %v174 = vld [vmem:[%s148 + $0x18] sm:$0xff]
        %v175 = vld [vmem:[%s148 + $0x20] sm:$0xff]
        %v176 = vld [vmem:[%s148 + $0x28] sm:$0xff]
        %v177 = vld [vmem:[%s148 + $0x30] sm:$0xff]
        %v178 = vld [vmem:[%s148 + $0x38] sm:$0xff]
        %v179 = vld [vmem:[%s148 + $0x40] sm:$0xff]
        %v180 = vld [vmem:[%s148 + $0x48] sm:$0xff]
        %v181 = vld [vmem:[%s148 + $0x50] sm:$0xff]
        %v182 = vld [vmem:[%s148 + $0x58] sm:$0xff]
        %v183 = vld [vmem:[%s148 + $0x60] sm:$0xff]
        %v184 = vld [vmem:[%s148 + $0x68] sm:$0xff]
        %v185 = vld [vmem:[%s148 + $0x70] sm:$0xff]
        %v186 = vld [vmem:[%s148 + $0x78] sm:$0xff]
        %v187 = vld [vmem:[%s148 + $0x80] sm:$0xff]
        %v188 = vld [vmem:[%s148 + $0x88] sm:$0xff]
        %v189 = vld [vmem:[%s148 + $0x90] sm:$0xff]
        %v190 = vld [vmem:[%s148 + $0x98] sm:$0xff]
        %v191 = vld [vmem:[%s148 + $0xa0] sm:$0xff]
        %v192 = vld [vmem:[%s148 + $0xa8] sm:$0xff]
        %v193 = vld [vmem:[%s148 + $0xb0] sm:$0xff]
        %v194 = vld [vmem:[%s148 + $0xb8] sm:$0xff]
        %v195 = vld [vmem:[%s148 + $0xc0] sm:$0xff]
        %v196 = vld [vmem:[%s148 + $0xc8] sm:$0xff]
        %v197 = vld [vmem:[%s148 + $0xd0] sm:$0xff]
        %v198 = vld [vmem:[%s148 + $0xd8] sm:$0xff]
        %v199 = vld [vmem:[%s148 + $0xe0] sm:$0xff]
        %v200 = vld [vmem:[%s148 + $0xe8] sm:$0xff]
        %v201 = vld [vmem:[%s148 + $0xf0] sm:$0xff]
        %v202 = vld [vmem:[%s148 + $0xf8] sm:$0xff]
        %v203 = vld [vmem:[%s148 + $0x100] sm:$0xff]
        %v204 = vld [vmem:[%s148 + $0x108] sm:$0xff]
        %v205 = vld [vmem:[%s148 + $0x110] sm:$0xff]
        %v206 = vld [vmem:[%s148 + $0x118] sm:$0xff]
        %v207 = vld [vmem:[%s148 + $0x120] sm:$0xff]
        %v208 = vld [vmem:[%s148 + $0x128] sm:$0xff]
        %v209 = vld [vmem:[%s148 + $0x130] sm:$0xff]
        %v210 = vld [vmem:[%s148 + $0x138] sm:$0xff]
        %v211 = vld [vmem:[%s148 + $0x140] sm:$0xff]
        %v212 = vld [vmem:[%s148 + $0x148] sm:$0xff]
        %v213 = vld [vmem:[%s148 + $0x150] sm:$0xff]
        %v214 = vld [vmem:[%s148 + $0x158] sm:$0xff]
        %v215 = vld [vmem:[%s148 + $0x160] sm:$0xff]
        %v216 = vld [vmem:[%s148 + $0x168] sm:$0xff]
        %v217 = vld [vmem:[%s148 + $0x170] sm:$0xff]
        %v218 = vld [vmem:[%s148 + $0x178] sm:$0xff]
        %v219 = vld [vmem:[%s148 + $0x180] sm:$0xff]
        %v220 = vld [vmem:[%s148 + $0x188] sm:$0xff]
        %v221 = vld [vmem:[%s148 + $0x190] sm:$0xff]
        %v222 = vld [vmem:[%s148 + $0x198] sm:$0xff]
        %v223 = vld [vmem:[%s148 + $0x1a0] sm:$0xff]
        %v224 = vld [vmem:[%s148 + $0x1a8] sm:$0xff]
        %v225 = vld [vmem:[%s148 + $0x1b0] sm:$0xff]
        %v226 = vld [vmem:[%s148 + $0x1b8] sm:$0xff]
        %v227 = vld [vmem:[%s148 + $0x1c0] sm:$0xff]
        %v228 = vld [vmem:[%s148 + $0x1c8] sm:$0xff]
        %v229 = vld [vmem:[%s148 + $0x1d0] sm:$0xff]
        %v230 = vld [vmem:[%s148 + $0x1d8] sm:$0xff]
        %v231 = vld [vmem:[%s148 + $0x1e0] sm:$0xff]
        %v232 = vld [vmem:[%s148 + $0x1e8] sm:$0xff]
        %v233 = vld [vmem:[%s148 + $0x1f0] sm:$0xff]
        %v234 = vld [vmem:[%s148 + $0x1f8] sm:$0xff]
        %v235 = vld [vmem:[%s148 + $0x200] sm:$0xff]
        %v236 = vld [vmem:[%s148 + $0x208] sm:$0xff]
        %v237 = vld [vmem:[%s148 + $0x210] sm:$0xff]
        %v238 = vld [vmem:[%s148 + $0x218] sm:$0xff]
        %v239 = vld [vmem:[%s148 + $0x220] sm:$0xff]
        %v240 = vld [vmem:[%s148 + $0x228] sm:$0xff]
        %v241 = vld [vmem:[%s148 + $0x230] sm:$0xff]
        %v242 = vld [vmem:[%s148 + $0x238] sm:$0xff]
        %v243 = vld [vmem:[%s148 + $0x240] sm:$0xff]
        %v244 = vld [vmem:[%s148 + $0x248] sm:$0xff]
        %v245 = vld [vmem:[%s148 + $0x250] sm:$0xff]
        %v246 = vld [vmem:[%s148 + $0x258] sm:$0xff]
        %v247 = vld [vmem:[%s148 + $0x260] sm:$0xff]
        %v248 = vld [vmem:[%s148 + $0x268] sm:$0xff]
        %v249 = vld [vmem:[%s148 + $0x270] sm:$0xff]
        %v250 = vld [vmem:[%s148 + $0x278] sm:$0xff]
        %v251 = vld [vmem:[%s148 + $0x280] sm:$0xff]
        %v252 = vld [vmem:[%s148 + $0x288] sm:$0xff]
        %v253 = vld [vmem:[%s148 + $0x290] sm:$0xff]
        %v254 = vld [vmem:[%s148 + $0x298] sm:$0xff]
        %v255 = vld [vmem:[%s148 + $0x2a0] sm:$0xff]
        %v256 = vld [vmem:[%s148 + $0x2a8] sm:$0xff]
        %v257 = vld [vmem:[%s148 + $0x2b0] sm:$0xff]
        %v258 = vld [vmem:[%s148 + $0x2b8] sm:$0xff]
        %v259 = vld [vmem:[%s148 + $0x2c0] sm:$0xff]
        %v260 = vld [vmem:[%s148 + $0x2c8] sm:$0xff]
        %v261 = vld [vmem:[%s148 + $0x2d0] sm:$0xff]
        %v262 = vld [vmem:[%s148 + $0x2d8] sm:$0xff]
        %v263 = vld [vmem:[%s148 + $0x2e0] sm:$0xff]
        %v264 = vld [vmem:[%s148 + $0x2e8] sm:$0xff]
        %v265 = vld [vmem:[%s148 + $0x2f0] sm:$0xff]
        %v266 = vld [vmem:[%s148 + $0x2f8] sm:$0xff]
        %v267 = vld [vmem:[%s148 + $0x300] sm:$0xff]
        %v268 = vld [vmem:[%s148 + $0x308] sm:$0xff]
        %v269 = vld [vmem:[%s148 + $0x310] sm:$0xff]
        %v270 = vld [vmem:[%s148 + $0x318] sm:$0xff]
        %v271 = vld [vmem:[%s148 + $0x320] sm:$0xff]
        %v272 = vld [vmem:[%s148 + $0x328] sm:$0xff]
        %v273 = vld [vmem:[%s148 + $0x330] sm:$0xff]
        %v274 = vld [vmem:[%s148 + $0x338] sm:$0xff]
        %v275 = vld [vmem:[%s148 + $0x340] sm:$0xff]
        %v276 = vld [vmem:[%s148 + $0x348] sm:$0xff]
        %v277 = vld [vmem:[%s148 + $0x350] sm:$0xff]
        %v278 = vld [vmem:[%s148 + $0x358] sm:$0xff]
        %v279 = vld [vmem:[%s148 + $0x360] sm:$0xff]
        %v280 = vld [vmem:[%s148 + $0x368] sm:$0xff]
        %v281 = vld [vmem:[%s148 + $0x370] sm:$0xff]
        %v282 = vld [vmem:[%s148 + $0x378] sm:$0xff]
        %v283 = vld [vmem:[%s148 + $0x380] sm:$0xff]
        %v284 = vld [vmem:[%s148 + $0x388] sm:$0xff]
        %v285 = vld [vmem:[%s148 + $0x390] sm:$0xff]
        %v286 = vld [vmem:[%s148 + $0x398] sm:$0xff]
        %v287 = vld [vmem:[%s148 + $0x3a0] sm:$0xff]
        %v288 = vld [vmem:[%s148 + $0x3a8] sm:$0xff]
        %v289 = vld [vmem:[%s148 + $0x3b0] sm:$0xff]
        %v290 = vld [vmem:[%s148 + $0x3b8] sm:$0xff]
        %v291 = vld [vmem:[%s148 + $0x3c0] sm:$0xff]
        %v292 = vld [vmem:[%s148 + $0x3c8] sm:$0xff]
        %v293 = vld [vmem:[%s148 + $0x3d0] sm:$0xff]
        %v294 = vld [vmem:[%s148 + $0x3d8] sm:$0xff]
        %v295 = vld [vmem:[%s148 + $0x3e0] sm:$0xff]
        %v296 = vld [vmem:[%s148 + $0x3e8] sm:$0xff]
        %v297 = vld [vmem:[%s148 + $0x3f0] sm:$0xff]
        %v298 = vld [vmem:[%s148 + $0x3f8] sm:$0xff]
        %v299 = vld [vmem:[%s148 + $0x400] sm:$0xff]
        %v300 = vld [vmem:[%s148 + $0x408] sm:$0xff]
        %v301 = vld [vmem:[%s148 + $0x410] sm:$0xff]
        %v302 = vld [vmem:[%s148 + $0x418] sm:$0xff]
        %v303 = vld [vmem:[%s148 + $0x420] sm:$0xff]
        %v304 = vld [vmem:[%s148 + $0x428] sm:$0xff]
        %v305 = vld [vmem:[%s148 + $0x430] sm:$0xff]
        %v306 = vld [vmem:[%s148 + $0x438] sm:$0xff]
        %v307 = vld [vmem:[%s148 + $0x440] sm:$0xff]
        %v308 = vld [vmem:[%s148 + $0x448] sm:$0xff]
        %v309 = vld [vmem:[%s148 + $0x450] sm:$0xff]
        %v310 = vld [vmem:[%s148 + $0x458] sm:$0xff]
        %v311 = vld [vmem:[%s148 + $0x460] sm:$0xff]
        %v312 = vld [vmem:[%s148 + $0x468] sm:$0xff]
        %v313 = vld [vmem:[%s148 + $0x470] sm:$0xff]
        %v314 = vld [vmem:[%s148 + $0x478] sm:$0xff]
        %v315 = vld [vmem:[%s148 + $0x480] sm:$0xff]
        %v316 = vld [vmem:[%s148 + $0x488] sm:$0xff]
        %v317 = vld [vmem:[%s148 + $0x490] sm:$0xff]
        %v318 = vld [vmem:[%s148 + $0x498] sm:$0xff]
        %v319 = vld [vmem:[%s148 + $0x4a0] sm:$0xff]
        %v320 = vld [vmem:[%s148 + $0x4a8] sm:$0xff]
        %v321 = vld [vmem:[%s148 + $0x4b0] sm:$0xff]
        %v322 = vld [vmem:[%s148 + $0x4b8] sm:$0xff]
        %v323 = vld [vmem:[%s148 + $0x4c0] sm:$0xff]
        %v324 = vld [vmem:[%s148 + $0x4c8] sm:$0xff]
        %v325 = vld [vmem:[%s148 + $0x4d0] sm:$0xff]
        %v326 = vld [vmem:[%s148 + $0x4d8] sm:$0xff]
        %v327 = vld [vmem:[%s148 + $0x4e0] sm:$0xff]
        %v328 = vld [vmem:[%s148 + $0x4e8] sm:$0xff]
        %v329 = vld [vmem:[%s148 + $0x4f0] sm:$0xff]
        %v330 = vld [vmem:[%s148 + $0x4f8] sm:$0xff]
        %v331 = vld [vmem:[%s148 + $0x500] sm:$0xff]
        %v332 = vld [vmem:[%s148 + $0x508] sm:$0xff]
        %v333 = vld [vmem:[%s148 + $0x510] sm:$0xff]
        %v334 = vld [vmem:[%s148 + $0x518] sm:$0xff]
        %v335 = vld [vmem:[%s148 + $0x520] sm:$0xff]
        %v336 = vld [vmem:[%s148 + $0x528] sm:$0xff]
        %v337 = vld [vmem:[%s148 + $0x530] sm:$0xff]
        %v338 = vld [vmem:[%s148 + $0x538] sm:$0xff]
        %v339 = vld [vmem:[%s148 + $0x540] sm:$0xff]
        %v340 = vld [vmem:[%s148 + $0x548] sm:$0xff]
        %v341 = vld [vmem:[%s148 + $0x550] sm:$0xff]
        %v342 = vld [vmem:[%s148 + $0x558] sm:$0xff]
        %v343 = vld [vmem:[%s148 + $0x560] sm:$0xff]
        %v344 = vld [vmem:[%s148 + $0x568] sm:$0xff]
        %v345 = vld [vmem:[%s148 + $0x570] sm:$0xff]
        %v346 = vld [vmem:[%s148 + $0x578] sm:$0xff]
        %v347 = vld [vmem:[%s148 + $0x580] sm:$0xff]
        %v348 = vld [vmem:[%s148 + $0x588] sm:$0xff]
        %v349 = vld [vmem:[%s148 + $0x590] sm:$0xff]
        %v350 = vld [vmem:[%s148 + $0x598] sm:$0xff]
        %v351 = vld [vmem:[%s148 + $0x5a0] sm:$0xff]
        %v352 = vld [vmem:[%s148 + $0x5a8] sm:$0xff]
        %v353 = vld [vmem:[%s148 + $0x5b0] sm:$0xff]
        %v354 = vld [vmem:[%s148 + $0x5b8] sm:$0xff]
        %v355 = vld [vmem:[%s148 + $0x5c0] sm:$0xff]
        %v356 = vld [vmem:[%s148 + $0x5c8] sm:$0xff]
        %v357 = vld [vmem:[%s148 + $0x5d0] sm:$0xff]
        %v358 = vld [vmem:[%s148 + $0x5d8] sm:$0xff]
        %v359 = vld [vmem:[%s148 + $0x5e0] sm:$0xff]
        %v360 = vld [vmem:[%s148 + $0x5e8] sm:$0xff]
        %v361 = vld [vmem:[%s148 + $0x5f0] sm:$0xff]
        %v362 = vld [vmem:[%s148 + $0x5f8] sm:$0xff]
        %v363 = vld [vmem:[%s148 + $0x600] sm:$0xff]
        %v364 = vld [vmem:[%s148 + $0x608] sm:$0xff]
        %v365 = vld [vmem:[%s148 + $0x610] sm:$0xff]
        %v366 = vld [vmem:[%s148 + $0x618] sm:$0xff]
        %v367 = vld [vmem:[%s148 + $0x620] sm:$0xff]
        %v368 = vld [vmem:[%s148 + $0x628] sm:$0xff]
        %v369 = vld [vmem:[%s148 + $0x630] sm:$0xff]
        %v370 = vld [vmem:[%s148 + $0x638] sm:$0xff]
        %v371 = vld [vmem:[%s148 + $0x640] sm:$0xff]
        %v372 = vld [vmem:[%s148 + $0x648] sm:$0xff]
        %v373 = vld [vmem:[%s148 + $0x650] sm:$0xff]
        %v374 = vld [vmem:[%s148 + $0x658] sm:$0xff]
        %v375 = vld [vmem:[%s148 + $0x660] sm:$0xff]
        %v376 = vld [vmem:[%s148 + $0x668] sm:$0xff]
        %v377 = vld [vmem:[%s148 + $0x670] sm:$0xff]
        %v378 = vld [vmem:[%s148 + $0x678] sm:$0xff]
        %v379 = vld [vmem:[%s148 + $0x680] sm:$0xff]
        %v380 = vld [vmem:[%s148 + $0x688] sm:$0xff]
        %v381 = vld [vmem:[%s148 + $0x690] sm:$0xff]
        %v382 = vld [vmem:[%s148 + $0x698] sm:$0xff]
        %v383 = vld [vmem:[%s148 + $0x6a0] sm:$0xff]
        %v384 = vld [vmem:[%s148 + $0x6a8] sm:$0xff]
        %v385 = vld [vmem:[%s148 + $0x6b0] sm:$0xff]
        %v386 = vld [vmem:[%s148 + $0x6b8] sm:$0xff]
        %v387 = vld [vmem:[%s148 + $0x6c0] sm:$0xff]
        %v388 = vld [vmem:[%s148 + $0x6c8] sm:$0xff]
        %v389 = vld [vmem:[%s148 + $0x6d0] sm:$0xff]
        %v390 = vld [vmem:[%s148 + $0x6d8] sm:$0xff]
        %v391 = vld [vmem:[%s148 + $0x6e0] sm:$0xff]
        %v392 = vld [vmem:[%s148 + $0x6e8] sm:$0xff]
        %v393 = vld [vmem:[%s148 + $0x6f0] sm:$0xff]
        %v394 = vld [vmem:[%s148 + $0x6f8] sm:$0xff]
        %v395 = vld [vmem:[%s148 + $0x700] sm:$0xff]
        %v396 = vld [vmem:[%s148 + $0x708] sm:$0xff]
        %v397 = vld [vmem:[%s148 + $0x710] sm:$0xff]
        %v398 = vld [vmem:[%s148 + $0x718] sm:$0xff]
        %v399 = vld [vmem:[%s148 + $0x720] sm:$0xff]
        %v400 = vld [vmem:[%s148 + $0x728] sm:$0xff]
        %v401 = vld [vmem:[%s148 + $0x730] sm:$0xff]
        %v402 = vld [vmem:[%s148 + $0x738] sm:$0xff]
        %v403 = vld [vmem:[%s148 + $0x740] sm:$0xff]
        %v404 = vld [vmem:[%s148 + $0x748] sm:$0xff]
        %v405 = vld [vmem:[%s148 + $0x750] sm:$0xff]
        %v406 = vld [vmem:[%s148 + $0x758] sm:$0xff]
        %v407 = vld [vmem:[%s148 + $0x760] sm:$0xff]
        %v408 = vld [vmem:[%s148 + $0x768] sm:$0xff]
        %v409 = vld [vmem:[%s148 + $0x770] sm:$0xff]
        %v410 = vld [vmem:[%s148 + $0x778] sm:$0xff]
        %v411 = vld [vmem:[%s148 + $0x780] sm:$0xff]
        %v412 = vld [vmem:[%s148 + $0x788] sm:$0xff]
        %v413 = vld [vmem:[%s148 + $0x790] sm:$0xff]
        %v414 = vld [vmem:[%s148 + $0x798] sm:$0xff]
        %v415 = vld [vmem:[%s148 + $0x7a0] sm:$0xff]
        %v416 = vld [vmem:[%s148 + $0x7a8] sm:$0xff]
        %v417 = vld [vmem:[%s148 + $0x7b0] sm:$0xff]
        %v418 = vld [vmem:[%s148 + $0x7b8] sm:$0xff]
        %v419 = vld [vmem:[%s148 + $0x7c0] sm:$0xff]
        %v420 = vld [vmem:[%s148 + $0x7c8] sm:$0xff]
        %v421 = vld [vmem:[%s148 + $0x7d0] sm:$0xff]
        %v422 = vld [vmem:[%s148 + $0x7d8] sm:$0xff]
        %v423 = vld [vmem:[%s148 + $0x7e0] sm:$0xff]
        %v424 = vld [vmem:[%s148 + $0x7e8] sm:$0xff]
        %v425 = vld [vmem:[%s148 + $0x7f0] sm:$0xff]
        %v426 = vld [vmem:[%s148 + $0x7f8] sm:$0xff]
        %v427 = vld [vmem:[%s148 + $0x800] sm:$0xff]
        %v428 = vld [vmem:[%s148 + $0x808] sm:$0xff]
        %v429 = vld [vmem:[%s148 + $0x810] sm:$0xff]
        %v430 = vld [vmem:[%s148 + $0x818] sm:$0xff]
        %v431 = vld [vmem:[%s148 + $0x820] sm:$0xff]
        %v432 = vld [vmem:[%s148 + $0x828] sm:$0xff]
        %v433 = vld [vmem:[%s148 + $0x830] sm:$0xff]
        %v434 = vld [vmem:[%s148 + $0x838] sm:$0xff]
        %v435 = vld [vmem:[%s148 + $0x840] sm:$0xff]
        %v436 = vld [vmem:[%s148 + $0x848] sm:$0xff]
        %v437 = vld [vmem:[%s148 + $0x850] sm:$0xff]
        %v438 = vld [vmem:[%s148 + $0x858] sm:$0xff]
        %v439 = vld [vmem:[%s148 + $0x860] sm:$0xff]
        %v440 = vld [vmem:[%s148 + $0x868] sm:$0xff]
        %v441 = vld [vmem:[%s148 + $0x870] sm:$0xff]
        %v442 = vld [vmem:[%s148 + $0x878] sm:$0xff]
        %v443 = vld [vmem:[%s148 + $0x880] sm:$0xff]
        %v444 = vld [vmem:[%s148 + $0x888] sm:$0xff]
        %v445 = vld [vmem:[%s148 + $0x890] sm:$0xff]
        %v446 = vld [vmem:[%s148 + $0x898] sm:$0xff]
        %v447 = vld [vmem:[%s148 + $0x8a0] sm:$0xff]
        %v448 = vld [vmem:[%s148 + $0x8a8] sm:$0xff]
        %v449 = vld [vmem:[%s148 + $0x8b0] sm:$0xff]
        %v450 = vld [vmem:[%s148 + $0x8b8] sm:$0xff]
        %v451 = vld [vmem:[%s148 + $0x8c0] sm:$0xff]
        %v452 = vld [vmem:[%s148 + $0x8c8] sm:$0xff]
        %v453 = vld [vmem:[%s148 + $0x8d0] sm:$0xff]
        %v454 = vld [vmem:[%s148 + $0x8d8] sm:$0xff]
        %v455 = vld [vmem:[%s148 + $0x8e0] sm:$0xff]
        %v456 = vld [vmem:[%s148 + $0x8e8] sm:$0xff]
        %v457 = vld [vmem:[%s148 + $0x8f0] sm:$0xff]
        %v458 = vld [vmem:[%s148 + $0x8f8] sm:$0xff]
        %v459 = vld [vmem:[%s148 + $0x900] sm:$0xff]
        %v460 = vld [vmem:[%s148 + $0x908] sm:$0xff]
        %v461 = vld [vmem:[%s148 + $0x910] sm:$0xff]
        %v462 = vld [vmem:[%s148 + $0x918] sm:$0xff]
        %v463 = vld [vmem:[%s148 + $0x920] sm:$0xff]
        %v464 = vld [vmem:[%s148 + $0x928] sm:$0xff]
        %v465 = vld [vmem:[%s148 + $0x930] sm:$0xff]
        %v466 = vld [vmem:[%s148 + $0x938] sm:$0xff]
        %v467 = vld [vmem:[%s148 + $0x940] sm:$0xff]
        %v468 = vld [vmem:[%s148 + $0x948] sm:$0xff]
        %v469 = vld [vmem:[%s148 + $0x950] sm:$0xff]
        %v470 = vld [vmem:[%s148 + $0x958] sm:$0xff]
        %v471 = vld [vmem:[%s148 + $0x960] sm:$0xff]
        %v472 = vld [vmem:[%s148 + $0x968] sm:$0xff]
        %v473 = vld [vmem:[%s148 + $0x970] sm:$0xff]
        %v474 = vld [vmem:[%s148 + $0x978] sm:$0xff]
        %v475 = vld [vmem:[%s148 + $0x980] sm:$0xff]
        %v476 = vld [vmem:[%s148 + $0x988] sm:$0xff]
        %v477 = vld [vmem:[%s148 + $0x990] sm:$0xff]
        %v478 = vld [vmem:[%s148 + $0x998] sm:$0xff]
        %v479 = vld [vmem:[%s148 + $0x9a0] sm:$0xff]
        %v480 = vld [vmem:[%s148 + $0x9a8] sm:$0xff]
        %v481 = vld [vmem:[%s148 + $0x9b0] sm:$0xff]
        %v482 = vld [vmem:[%s148 + $0x9b8] sm:$0xff]
        %v483 = vld [vmem:[%s148 + $0x9c0] sm:$0xff]
        %v484 = vld [vmem:[%s148 + $0x9c8] sm:$0xff]
        %v485 = vld [vmem:[%s148 + $0x9d0] sm:$0xff]
        %v486 = vld [vmem:[%s148 + $0x9d8] sm:$0xff]
        %v487 = vld [vmem:[%s148 + $0x9e0] sm:$0xff]
        %v488 = vld [vmem:[%s148 + $0x9e8] sm:$0xff]
        %v489 = vld [vmem:[%s148 + $0x9f0] sm:$0xff]
        %v490 = vld [vmem:[%s148 + $0x9f8] sm:$0xff]
        %491 = vxpose.xlu0.b32.start [1/16] %v171, 128
        %492 = vxpose.xlu0.b32.cont [2/16] %v175, 128
        %493 = vxpose.xlu0.b32.cont [3/16] %v179, 128
        %494 = vxpose.xlu0.b32.cont [4/16] %v183, 128
        %495 = vxpose.xlu0.b32.cont [5/16] %v187, 128
        %496 = vxpose.xlu0.b32.cont [6/16] %v191, 128
        %497 = vxpose.xlu0.b32.cont [7/16] %v195, 128
        %498 = vxpose.xlu0.b32.cont [8/16] %v199, 128
        %499 = vxpose.xlu0.b32.cont [9/16] %v203, 128
        %500 = vxpose.xlu0.b32.cont [10/16] %v207, 128
        %501 = vxpose.xlu0.b32.cont [11/16] %v211, 128
        %502 = vxpose.xlu0.b32.cont [12/16] %v215, 128
        %503 = vxpose.xlu0.b32.cont [13/16] %v219, 128
        %504 = vxpose.xlu0.b32.cont [14/16] %v223, 128
        %505 = vxpose.xlu0.b32.cont [15/16] %v227, 128
        %506 = vxpose.xlu0.b32.end [16/16] %v231, 128
        %v507 = vpop.trf.xlu0
        %v508 = vpop.trf.xlu0
        %v509 = vpop.trf.xlu0
        %v510 = vpop.trf.xlu0
        %v511 = vpop.trf.xlu0
        %v512 = vpop.trf.xlu0
        %v513 = vpop.trf.xlu0
        %v514 = vpop.trf.xlu0
        %v515 = vpop.trf.xlu0
        %v516 = vpop.trf.xlu0
        %v517 = vpop.trf.xlu0
        %v518 = vpop.trf.xlu0
        %v519 = vpop.trf.xlu0
        %v520 = vpop.trf.xlu0
        %v521 = vpop.trf.xlu0
        %v522 = vpop.trf.xlu0
        %523 = vxpose.xlu0.b32.start [1/16] %v172, 128
        %524 = vxpose.xlu0.b32.cont [2/16] %v176, 128
        %525 = vxpose.xlu0.b32.cont [3/16] %v180, 128
        %526 = vxpose.xlu0.b32.cont [4/16] %v184, 128
        %527 = vxpose.xlu0.b32.cont [5/16] %v188, 128
        %528 = vxpose.xlu0.b32.cont [6/16] %v192, 128
        %529 = vxpose.xlu0.b32.cont [7/16] %v196, 128
        %530 = vxpose.xlu0.b32.cont [8/16] %v200, 128
        %531 = vxpose.xlu0.b32.cont [9/16] %v204, 128
        %532 = vxpose.xlu0.b32.cont [10/16] %v208, 128
        %533 = vxpose.xlu0.b32.cont [11/16] %v212, 128
        %534 = vxpose.xlu0.b32.cont [12/16] %v216, 128
        %535 = vxpose.xlu0.b32.cont [13/16] %v220, 128
        %536 = vxpose.xlu0.b32.cont [14/16] %v224, 128
        %537 = vxpose.xlu0.b32.cont [15/16] %v228, 128
        %538 = vxpose.xlu0.b32.end [16/16] %v232, 128
        %v539 = vpop.trf.xlu0
        %v540 = vpop.trf.xlu0
        %v541 = vpop.trf.xlu0
        %v542 = vpop.trf.xlu0
        %v543 = vpop.trf.xlu0
        %v544 = vpop.trf.xlu0
        %v545 = vpop.trf.xlu0
        %v546 = vpop.trf.xlu0
        %v547 = vpop.trf.xlu0
        %v548 = vpop.trf.xlu0
        %v549 = vpop.trf.xlu0
        %v550 = vpop.trf.xlu0
        %v551 = vpop.trf.xlu0
        %v552 = vpop.trf.xlu0
        %v553 = vpop.trf.xlu0
        %v554 = vpop.trf.xlu0
        %555 = vxpose.xlu0.b32.start [1/16] %v173, 128
        %556 = vxpose.xlu0.b32.cont [2/16] %v177, 128
        %557 = vxpose.xlu0.b32.cont [3/16] %v181, 128
        %558 = vxpose.xlu0.b32.cont [4/16] %v185, 128
        %559 = vxpose.xlu0.b32.cont [5/16] %v189, 128
        %560 = vxpose.xlu0.b32.cont [6/16] %v193, 128
        %561 = vxpose.xlu0.b32.cont [7/16] %v197, 128
        %562 = vxpose.xlu0.b32.cont [8/16] %v201, 128
        %563 = vxpose.xlu0.b32.cont [9/16] %v205, 128
        %564 = vxpose.xlu0.b32.cont [10/16] %v209, 128
        %565 = vxpose.xlu0.b32.cont [11/16] %v213, 128
        %566 = vxpose.xlu0.b32.cont [12/16] %v217, 128
        %567 = vxpose.xlu0.b32.cont [13/16] %v221, 128
        %568 = vxpose.xlu0.b32.cont [14/16] %v225, 128
        %569 = vxpose.xlu0.b32.cont [15/16] %v229, 128
        %570 = vxpose.xlu0.b32.end [16/16] %v233, 128
        %v571 = vpop.trf.xlu0
        %v572 = vpop.trf.xlu0
        %v573 = vpop.trf.xlu0
        %v574 = vpop.trf.xlu0
        %v575 = vpop.trf.xlu0
        %v576 = vpop.trf.xlu0
        %v577 = vpop.trf.xlu0
        %v578 = vpop.trf.xlu0
        %v579 = vpop.trf.xlu0
        %v580 = vpop.trf.xlu0
        %v581 = vpop.trf.xlu0
        %v582 = vpop.trf.xlu0
        %v583 = vpop.trf.xlu0
        %v584 = vpop.trf.xlu0
        %v585 = vpop.trf.xlu0
        %v586 = vpop.trf.xlu0
        %587 = vxpose.xlu0.b32.start [1/16] %v174, 128
        %588 = vxpose.xlu0.b32.cont [2/16] %v178, 128
        %589 = vxpose.xlu0.b32.cont [3/16] %v182, 128
        %590 = vxpose.xlu0.b32.cont [4/16] %v186, 128
        %591 = vxpose.xlu0.b32.cont [5/16] %v190, 128
        %592 = vxpose.xlu0.b32.cont [6/16] %v194, 128
        %593 = vxpose.xlu0.b32.cont [7/16] %v198, 128
        %594 = vxpose.xlu0.b32.cont [8/16] %v202, 128
        %595 = vxpose.xlu0.b32.cont [9/16] %v206, 128
        %596 = vxpose.xlu0.b32.cont [10/16] %v210, 128
        %597 = vxpose.xlu0.b32.cont [11/16] %v214, 128
        %598 = vxpose.xlu0.b32.cont [12/16] %v218, 128
        %599 = vxpose.xlu0.b32.cont [13/16] %v222, 128
        %600 = vxpose.xlu0.b32.cont [14/16] %v226, 128
        %601 = vxpose.xlu0.b32.cont [15/16] %v230, 128
        %602 = vxpose.xlu0.b32.end [16/16] %v234, 128
        %v603 = vpop.trf.xlu0
        %v604 = vpop.trf.xlu0
        %v605 = vpop.trf.xlu0
        %v606 = vpop.trf.xlu0
        %v607 = vpop.trf.xlu0
        %v608 = vpop.trf.xlu0
        %v609 = vpop.trf.xlu0
        %v610 = vpop.trf.xlu0
        %v611 = vpop.trf.xlu0
        %v612 = vpop.trf.xlu0
        %v613 = vpop.trf.xlu0
        %v614 = vpop.trf.xlu0
        %v615 = vpop.trf.xlu0
        %v616 = vpop.trf.xlu0
        %v617 = vpop.trf.xlu0
        %v618 = vpop.trf.xlu0
        %619 = vxpose.xlu0.b32.start [1/16] %v235, 128
        %620 = vxpose.xlu0.b32.cont [2/16] %v239, 128
        %621 = vxpose.xlu0.b32.cont [3/16] %v243, 128
        %622 = vxpose.xlu0.b32.cont [4/16] %v247, 128
        %623 = vxpose.xlu0.b32.cont [5/16] %v251, 128
        %624 = vxpose.xlu0.b32.cont [6/16] %v255, 128
        %625 = vxpose.xlu0.b32.cont [7/16] %v259, 128
        %626 = vxpose.xlu0.b32.cont [8/16] %v263, 128
        %627 = vxpose.xlu0.b32.cont [9/16] %v267, 128
        %628 = vxpose.xlu0.b32.cont [10/16] %v271, 128
        %629 = vxpose.xlu0.b32.cont [11/16] %v275, 128
        %630 = vxpose.xlu0.b32.cont [12/16] %v279, 128
        %631 = vxpose.xlu0.b32.cont [13/16] %v283, 128
        %632 = vxpose.xlu0.b32.cont [14/16] %v287, 128
        %633 = vxpose.xlu0.b32.cont [15/16] %v291, 128
        %634 = vxpose.xlu0.b32.end [16/16] %v295, 128
        %v635 = vpop.trf.xlu0
        %v636 = vpop.trf.xlu0
        %v637 = vpop.trf.xlu0
        %v638 = vpop.trf.xlu0
        %v639 = vpop.trf.xlu0
        %v640 = vpop.trf.xlu0
        %v641 = vpop.trf.xlu0
        %v642 = vpop.trf.xlu0
        %v643 = vpop.trf.xlu0
        %v644 = vpop.trf.xlu0
        %v645 = vpop.trf.xlu0
        %v646 = vpop.trf.xlu0
        %v647 = vpop.trf.xlu0
        %v648 = vpop.trf.xlu0
        %v649 = vpop.trf.xlu0
        %v650 = vpop.trf.xlu0
        %651 = vxpose.xlu0.b32.start [1/16] %v236, 128
        %652 = vxpose.xlu0.b32.cont [2/16] %v240, 128
        %653 = vxpose.xlu0.b32.cont [3/16] %v244, 128
        %654 = vxpose.xlu0.b32.cont [4/16] %v248, 128
        %655 = vxpose.xlu0.b32.cont [5/16] %v252, 128
        %656 = vxpose.xlu0.b32.cont [6/16] %v256, 128
        %657 = vxpose.xlu0.b32.cont [7/16] %v260, 128
        %658 = vxpose.xlu0.b32.cont [8/16] %v264, 128
        %659 = vxpose.xlu0.b32.cont [9/16] %v268, 128
        %660 = vxpose.xlu0.b32.cont [10/16] %v272, 128
        %661 = vxpose.xlu0.b32.cont [11/16] %v276, 128
        %662 = vxpose.xlu0.b32.cont [12/16] %v280, 128
        %663 = vxpose.xlu0.b32.cont [13/16] %v284, 128
        %664 = vxpose.xlu0.b32.cont [14/16] %v288, 128
        %665 = vxpose.xlu0.b32.cont [15/16] %v292, 128
        %666 = vxpose.xlu0.b32.end [16/16] %v296, 128
        %v667 = vpop.trf.xlu0
        %v668 = vpop.trf.xlu0
        %v669 = vpop.trf.xlu0
        %v670 = vpop.trf.xlu0
        %v671 = vpop.trf.xlu0
        %v672 = vpop.trf.xlu0
        %v673 = vpop.trf.xlu0
        %v674 = vpop.trf.xlu0
        %v675 = vpop.trf.xlu0
        %v676 = vpop.trf.xlu0
        %v677 = vpop.trf.xlu0
        %v678 = vpop.trf.xlu0
        %v679 = vpop.trf.xlu0
        %v680 = vpop.trf.xlu0
        %v681 = vpop.trf.xlu0
        %v682 = vpop.trf.xlu0
        %683 = vxpose.xlu0.b32.start [1/16] %v237, 128
        %684 = vxpose.xlu0.b32.cont [2/16] %v241, 128
        %685 = vxpose.xlu0.b32.cont [3/16] %v245, 128
        %686 = vxpose.xlu0.b32.cont [4/16] %v249, 128
        %687 = vxpose.xlu0.b32.cont [5/16] %v253, 128
        %688 = vxpose.xlu0.b32.cont [6/16] %v257, 128
        %689 = vxpose.xlu0.b32.cont [7/16] %v261, 128
        %690 = vxpose.xlu0.b32.cont [8/16] %v265, 128
        %691 = vxpose.xlu0.b32.cont [9/16] %v269, 128
        %692 = vxpose.xlu0.b32.cont [10/16] %v273, 128
        %693 = vxpose.xlu0.b32.cont [11/16] %v277, 128
        %694 = vxpose.xlu0.b32.cont [12/16] %v281, 128
        %695 = vxpose.xlu0.b32.cont [13/16] %v285, 128
        %696 = vxpose.xlu0.b32.cont [14/16] %v289, 128
        %697 = vxpose.xlu0.b32.cont [15/16] %v293, 128
        %698 = vxpose.xlu0.b32.end [16/16] %v297, 128
        %v699 = vpop.trf.xlu0
        %v700 = vpop.trf.xlu0
        %v701 = vpop.trf.xlu0
        %v702 = vpop.trf.xlu0
        %v703 = vpop.trf.xlu0
        %v704 = vpop.trf.xlu0
        %v705 = vpop.trf.xlu0
        %v706 = vpop.trf.xlu0
        %v707 = vpop.trf.xlu0
        %v708 = vpop.trf.xlu0
        %v709 = vpop.trf.xlu0
        %v710 = vpop.trf.xlu0
        %v711 = vpop.trf.xlu0
        %v712 = vpop.trf.xlu0
        %v713 = vpop.trf.xlu0
        %v714 = vpop.trf.xlu0
        %715 = vxpose.xlu0.b32.start [1/16] %v238, 128
        %716 = vxpose.xlu0.b32.cont [2/16] %v242, 128
        %717 = vxpose.xlu0.b32.cont [3/16] %v246, 128
        %718 = vxpose.xlu0.b32.cont [4/16] %v250, 128
        %719 = vxpose.xlu0.b32.cont [5/16] %v254, 128
        %720 = vxpose.xlu0.b32.cont [6/16] %v258, 128
        %721 = vxpose.xlu0.b32.cont [7/16] %v262, 128
        %722 = vxpose.xlu0.b32.cont [8/16] %v266, 128
        %723 = vxpose.xlu0.b32.cont [9/16] %v270, 128
        %724 = vxpose.xlu0.b32.cont [10/16] %v274, 128
        %725 = vxpose.xlu0.b32.cont [11/16] %v278, 128
        %726 = vxpose.xlu0.b32.cont [12/16] %v282, 128
        %727 = vxpose.xlu0.b32.cont [13/16] %v286, 128
        %728 = vxpose.xlu0.b32.cont [14/16] %v290, 128
        %729 = vxpose.xlu0.b32.cont [15/16] %v294, 128
        %730 = vxpose.xlu0.b32.end [16/16] %v298, 128
        %v731 = vpop.trf.xlu0
        %v732 = vpop.trf.xlu0
        %v733 = vpop.trf.xlu0
        %v734 = vpop.trf.xlu0
        %v735 = vpop.trf.xlu0
        %v736 = vpop.trf.xlu0
        %v737 = vpop.trf.xlu0
        %v738 = vpop.trf.xlu0
        %v739 = vpop.trf.xlu0
        %v740 = vpop.trf.xlu0
        %v741 = vpop.trf.xlu0
        %v742 = vpop.trf.xlu0
        %v743 = vpop.trf.xlu0
        %v744 = vpop.trf.xlu0
        %v745 = vpop.trf.xlu0
        %v746 = vpop.trf.xlu0
        %747 = vxpose.xlu0.b32.start [1/16] %v299, 128
        %748 = vxpose.xlu0.b32.cont [2/16] %v303, 128
        %749 = vxpose.xlu0.b32.cont [3/16] %v307, 128
        %750 = vxpose.xlu0.b32.cont [4/16] %v311, 128
        %751 = vxpose.xlu0.b32.cont [5/16] %v315, 128
        %752 = vxpose.xlu0.b32.cont [6/16] %v319, 128
        %753 = vxpose.xlu0.b32.cont [7/16] %v323, 128
        %754 = vxpose.xlu0.b32.cont [8/16] %v327, 128
        %755 = vxpose.xlu0.b32.cont [9/16] %v331, 128
        %756 = vxpose.xlu0.b32.cont [10/16] %v335, 128
        %757 = vxpose.xlu0.b32.cont [11/16] %v339, 128
        %758 = vxpose.xlu0.b32.cont [12/16] %v343, 128
        %759 = vxpose.xlu0.b32.cont [13/16] %v347, 128
        %760 = vxpose.xlu0.b32.cont [14/16] %v351, 128
        %761 = vxpose.xlu0.b32.cont [15/16] %v355, 128
        %762 = vxpose.xlu0.b32.end [16/16] %v359, 128
        %v763 = vpop.trf.xlu0
        %v764 = vpop.trf.xlu0
        %v765 = vpop.trf.xlu0
        %v766 = vpop.trf.xlu0
        %v767 = vpop.trf.xlu0
        %v768 = vpop.trf.xlu0
        %v769 = vpop.trf.xlu0
        %v770 = vpop.trf.xlu0
        %v771 = vpop.trf.xlu0
        %v772 = vpop.trf.xlu0
        %v773 = vpop.trf.xlu0
        %v774 = vpop.trf.xlu0
        %v775 = vpop.trf.xlu0
        %v776 = vpop.trf.xlu0
        %v777 = vpop.trf.xlu0
        %v778 = vpop.trf.xlu0
        %779 = vxpose.xlu0.b32.start [1/16] %v300, 128
        %780 = vxpose.xlu0.b32.cont [2/16] %v304, 128
        %781 = vxpose.xlu0.b32.cont [3/16] %v308, 128
        %782 = vxpose.xlu0.b32.cont [4/16] %v312, 128
        %783 = vxpose.xlu0.b32.cont [5/16] %v316, 128
        %784 = vxpose.xlu0.b32.cont [6/16] %v320, 128
        %785 = vxpose.xlu0.b32.cont [7/16] %v324, 128
        %786 = vxpose.xlu0.b32.cont [8/16] %v328, 128
        %787 = vxpose.xlu0.b32.cont [9/16] %v332, 128
        %788 = vxpose.xlu0.b32.cont [10/16] %v336, 128
        %789 = vxpose.xlu0.b32.cont [11/16] %v340, 128
        %790 = vxpose.xlu0.b32.cont [12/16] %v344, 128
        %791 = vxpose.xlu0.b32.cont [13/16] %v348, 128
        %792 = vxpose.xlu0.b32.cont [14/16] %v352, 128
        %793 = vxpose.xlu0.b32.cont [15/16] %v356, 128
        %794 = vxpose.xlu0.b32.end [16/16] %v360, 128
        %v795 = vpop.trf.xlu0
        %v796 = vpop.trf.xlu0
        %v797 = vpop.trf.xlu0
        %v798 = vpop.trf.xlu0
        %v799 = vpop.trf.xlu0
        %v800 = vpop.trf.xlu0
        %v801 = vpop.trf.xlu0
        %v802 = vpop.trf.xlu0
        %v803 = vpop.trf.xlu0
        %v804 = vpop.trf.xlu0
        %v805 = vpop.trf.xlu0
        %v806 = vpop.trf.xlu0
        %v807 = vpop.trf.xlu0
        %v808 = vpop.trf.xlu0
        %v809 = vpop.trf.xlu0
        %v810 = vpop.trf.xlu0
        %811 = vxpose.xlu0.b32.start [1/16] %v301, 128
        %812 = vxpose.xlu0.b32.cont [2/16] %v305, 128
        %813 = vxpose.xlu0.b32.cont [3/16] %v309, 128
        %814 = vxpose.xlu0.b32.cont [4/16] %v313, 128
        %815 = vxpose.xlu0.b32.cont [5/16] %v317, 128
        %816 = vxpose.xlu0.b32.cont [6/16] %v321, 128
        %817 = vxpose.xlu0.b32.cont [7/16] %v325, 128
        %818 = vxpose.xlu0.b32.cont [8/16] %v329, 128
        %819 = vxpose.xlu0.b32.cont [9/16] %v333, 128
        %820 = vxpose.xlu0.b32.cont [10/16] %v337, 128
        %821 = vxpose.xlu0.b32.cont [11/16] %v341, 128
        %822 = vxpose.xlu0.b32.cont [12/16] %v345, 128
        %823 = vxpose.xlu0.b32.cont [13/16] %v349, 128
        %824 = vxpose.xlu0.b32.cont [14/16] %v353, 128
        %825 = vxpose.xlu0.b32.cont [15/16] %v357, 128
        %826 = vxpose.xlu0.b32.end [16/16] %v361, 128
        %v827 = vpop.trf.xlu0
        %v828 = vpop.trf.xlu0
        %v829 = vpop.trf.xlu0
        %v830 = vpop.trf.xlu0
        %v831 = vpop.trf.xlu0
        %v832 = vpop.trf.xlu0
        %v833 = vpop.trf.xlu0
        %v834 = vpop.trf.xlu0
        %v835 = vpop.trf.xlu0
        %v836 = vpop.trf.xlu0
        %v837 = vpop.trf.xlu0
        %v838 = vpop.trf.xlu0
        %v839 = vpop.trf.xlu0
        %v840 = vpop.trf.xlu0
        %v841 = vpop.trf.xlu0
        %v842 = vpop.trf.xlu0
        %843 = vxpose.xlu0.b32.start [1/16] %v302, 128
        %844 = vxpose.xlu0.b32.cont [2/16] %v306, 128
        %845 = vxpose.xlu0.b32.cont [3/16] %v310, 128
        %846 = vxpose.xlu0.b32.cont [4/16] %v314, 128
        %847 = vxpose.xlu0.b32.cont [5/16] %v318, 128
        %848 = vxpose.xlu0.b32.cont [6/16] %v322, 128
        %849 = vxpose.xlu0.b32.cont [7/16] %v326, 128
        %850 = vxpose.xlu0.b32.cont [8/16] %v330, 128
        %851 = vxpose.xlu0.b32.cont [9/16] %v334, 128
        %852 = vxpose.xlu0.b32.cont [10/16] %v338, 128
        %853 = vxpose.xlu0.b32.cont [11/16] %v342, 128
        %854 = vxpose.xlu0.b32.cont [12/16] %v346, 128
        %855 = vxpose.xlu0.b32.cont [13/16] %v350, 128
        %856 = vxpose.xlu0.b32.cont [14/16] %v354, 128
        %857 = vxpose.xlu0.b32.cont [15/16] %v358, 128
        %858 = vxpose.xlu0.b32.end [16/16] %v362, 128
        %v859 = vpop.trf.xlu0
        %v860 = vpop.trf.xlu0
        %v861 = vpop.trf.xlu0
        %v862 = vpop.trf.xlu0
        %v863 = vpop.trf.xlu0
        %v864 = vpop.trf.xlu0
        %v865 = vpop.trf.xlu0
        %v866 = vpop.trf.xlu0
        %v867 = vpop.trf.xlu0
        %v868 = vpop.trf.xlu0
        %v869 = vpop.trf.xlu0
        %v870 = vpop.trf.xlu0
        %v871 = vpop.trf.xlu0
        %v872 = vpop.trf.xlu0
        %v873 = vpop.trf.xlu0
        %v874 = vpop.trf.xlu0
        %875 = vxpose.xlu0.b32.start [1/16] %v363, 128
        %876 = vxpose.xlu0.b32.cont [2/16] %v367, 128
        %877 = vxpose.xlu0.b32.cont [3/16] %v371, 128
        %878 = vxpose.xlu0.b32.cont [4/16] %v375, 128
        %879 = vxpose.xlu0.b32.cont [5/16] %v379, 128
        %880 = vxpose.xlu0.b32.cont [6/16] %v383, 128
        %881 = vxpose.xlu0.b32.cont [7/16] %v387, 128
        %882 = vxpose.xlu0.b32.cont [8/16] %v391, 128
        %883 = vxpose.xlu0.b32.cont [9/16] %v395, 128
        %884 = vxpose.xlu0.b32.cont [10/16] %v399, 128
        %885 = vxpose.xlu0.b32.cont [11/16] %v403, 128
        %886 = vxpose.xlu0.b32.cont [12/16] %v407, 128
        %887 = vxpose.xlu0.b32.cont [13/16] %v411, 128
        %888 = vxpose.xlu0.b32.cont [14/16] %v415, 128
        %889 = vxpose.xlu0.b32.cont [15/16] %v419, 128
        %890 = vxpose.xlu0.b32.end [16/16] %v423, 128
        %v891 = vpop.trf.xlu0
        %v892 = vpop.trf.xlu0
        %v893 = vpop.trf.xlu0
        %v894 = vpop.trf.xlu0
        %v895 = vpop.trf.xlu0
        %v896 = vpop.trf.xlu0
        %v897 = vpop.trf.xlu0
        %v898 = vpop.trf.xlu0
        %v899 = vpop.trf.xlu0
        %v900 = vpop.trf.xlu0
        %v901 = vpop.trf.xlu0
        %v902 = vpop.trf.xlu0
        %v903 = vpop.trf.xlu0
        %v904 = vpop.trf.xlu0
        %v905 = vpop.trf.xlu0
        %v906 = vpop.trf.xlu0
        %907 = vxpose.xlu0.b32.start [1/16] %v364, 128
        %908 = vxpose.xlu0.b32.cont [2/16] %v368, 128
        %909 = vxpose.xlu0.b32.cont [3/16] %v372, 128
        %910 = vxpose.xlu0.b32.cont [4/16] %v376, 128
        %911 = vxpose.xlu0.b32.cont [5/16] %v380, 128
        %912 = vxpose.xlu0.b32.cont [6/16] %v384, 128
        %913 = vxpose.xlu0.b32.cont [7/16] %v388, 128
        %914 = vxpose.xlu0.b32.cont [8/16] %v392, 128
        %915 = vxpose.xlu0.b32.cont [9/16] %v396, 128
        %916 = vxpose.xlu0.b32.cont [10/16] %v400, 128
        %917 = vxpose.xlu0.b32.cont [11/16] %v404, 128
        %918 = vxpose.xlu0.b32.cont [12/16] %v408, 128
        %919 = vxpose.xlu0.b32.cont [13/16] %v412, 128
        %920 = vxpose.xlu0.b32.cont [14/16] %v416, 128
        %921 = vxpose.xlu0.b32.cont [15/16] %v420, 128
        %922 = vxpose.xlu0.b32.end [16/16] %v424, 128
        %v923 = vpop.trf.xlu0
        %v924 = vpop.trf.xlu0
        %v925 = vpop.trf.xlu0
        %v926 = vpop.trf.xlu0
        %v927 = vpop.trf.xlu0
        %v928 = vpop.trf.xlu0
        %v929 = vpop.trf.xlu0
        %v930 = vpop.trf.xlu0
        %v931 = vpop.trf.xlu0
        %v932 = vpop.trf.xlu0
        %v933 = vpop.trf.xlu0
        %v934 = vpop.trf.xlu0
        %v935 = vpop.trf.xlu0
        %v936 = vpop.trf.xlu0
        %v937 = vpop.trf.xlu0
        %v938 = vpop.trf.xlu0
        %939 = vxpose.xlu0.b32.start [1/16] %v365, 128
        %940 = vxpose.xlu0.b32.cont [2/16] %v369, 128
        %941 = vxpose.xlu0.b32.cont [3/16] %v373, 128
        %942 = vxpose.xlu0.b32.cont [4/16] %v377, 128
        %943 = vxpose.xlu0.b32.cont [5/16] %v381, 128
        %944 = vxpose.xlu0.b32.cont [6/16] %v385, 128
        %945 = vxpose.xlu0.b32.cont [7/16] %v389, 128
        %946 = vxpose.xlu0.b32.cont [8/16] %v393, 128
        %947 = vxpose.xlu0.b32.cont [9/16] %v397, 128
        %948 = vxpose.xlu0.b32.cont [10/16] %v401, 128
        %949 = vxpose.xlu0.b32.cont [11/16] %v405, 128
        %950 = vxpose.xlu0.b32.cont [12/16] %v409, 128
        %951 = vxpose.xlu0.b32.cont [13/16] %v413, 128
        %952 = vxpose.xlu0.b32.cont [14/16] %v417, 128
        %953 = vxpose.xlu0.b32.cont [15/16] %v421, 128
        %954 = vxpose.xlu0.b32.end [16/16] %v425, 128
        %v955 = vpop.trf.xlu0
        %v956 = vpop.trf.xlu0
        %v957 = vpop.trf.xlu0
        %v958 = vpop.trf.xlu0
        %v959 = vpop.trf.xlu0
        %v960 = vpop.trf.xlu0
        %v961 = vpop.trf.xlu0
        %v962 = vpop.trf.xlu0
        %v963 = vpop.trf.xlu0
        %v964 = vpop.trf.xlu0
        %v965 = vpop.trf.xlu0
        %v966 = vpop.trf.xlu0
        %v967 = vpop.trf.xlu0
        %v968 = vpop.trf.xlu0
        %v969 = vpop.trf.xlu0
        %v970 = vpop.trf.xlu0
        %971 = vxpose.xlu0.b32.start [1/16] %v366, 128
        %972 = vxpose.xlu0.b32.cont [2/16] %v370, 128
        %973 = vxpose.xlu0.b32.cont [3/16] %v374, 128
        %974 = vxpose.xlu0.b32.cont [4/16] %v378, 128
        %975 = vxpose.xlu0.b32.cont [5/16] %v382, 128
        %976 = vxpose.xlu0.b32.cont [6/16] %v386, 128
        %977 = vxpose.xlu0.b32.cont [7/16] %v390, 128
        %978 = vxpose.xlu0.b32.cont [8/16] %v394, 128
        %979 = vxpose.xlu0.b32.cont [9/16] %v398, 128
        %980 = vxpose.xlu0.b32.cont [10/16] %v402, 128
        %981 = vxpose.xlu0.b32.cont [11/16] %v406, 128
        %982 = vxpose.xlu0.b32.cont [12/16] %v410, 128
        %983 = vxpose.xlu0.b32.cont [13/16] %v414, 128
        %984 = vxpose.xlu0.b32.cont [14/16] %v418, 128
        %985 = vxpose.xlu0.b32.cont [15/16] %v422, 128
        %986 = vxpose.xlu0.b32.end [16/16] %v426, 128
        %v987 = vpop.trf.xlu0
        %v988 = vpop.trf.xlu0
        %v989 = vpop.trf.xlu0
        %v990 = vpop.trf.xlu0
        %v991 = vpop.trf.xlu0
        %v992 = vpop.trf.xlu0
        %v993 = vpop.trf.xlu0
        %v994 = vpop.trf.xlu0
        %v995 = vpop.trf.xlu0
        %v996 = vpop.trf.xlu0
        %v997 = vpop.trf.xlu0
        %v998 = vpop.trf.xlu0
        %v999 = vpop.trf.xlu0
        %v1000 = vpop.trf.xlu0
        %v1001 = vpop.trf.xlu0
        %v1002 = vpop.trf.xlu0
        %1003 = vxpose.xlu0.b32.start [1/16] %v427, 128
        %1004 = vxpose.xlu0.b32.cont [2/16] %v431, 128
        %1005 = vxpose.xlu0.b32.cont [3/16] %v435, 128
        %1006 = vxpose.xlu0.b32.cont [4/16] %v439, 128
        %1007 = vxpose.xlu0.b32.cont [5/16] %v443, 128
        %1008 = vxpose.xlu0.b32.cont [6/16] %v447, 128
        %1009 = vxpose.xlu0.b32.cont [7/16] %v451, 128
        %1010 = vxpose.xlu0.b32.cont [8/16] %v455, 128
        %1011 = vxpose.xlu0.b32.cont [9/16] %v459, 128
        %1012 = vxpose.xlu0.b32.cont [10/16] %v463, 128
        %1013 = vxpose.xlu0.b32.cont [11/16] %v467, 128
        %1014 = vxpose.xlu0.b32.cont [12/16] %v471, 128
        %1015 = vxpose.xlu0.b32.cont [13/16] %v475, 128
        %1016 = vxpose.xlu0.b32.cont [14/16] %v479, 128
        %1017 = vxpose.xlu0.b32.cont [15/16] %v483, 128
        %1018 = vxpose.xlu0.b32.end [16/16] %v487, 128
        %v1019 = vpop.trf.xlu0
        %v1020 = vpop.trf.xlu0
        %v1021 = vpop.trf.xlu0
        %v1022 = vpop.trf.xlu0
        %v1023 = vpop.trf.xlu0
        %v1024 = vpop.trf.xlu0
        %v1025 = vpop.trf.xlu0
        %v1026 = vpop.trf.xlu0
        %v1027 = vpop.trf.xlu0
        %v1028 = vpop.trf.xlu0
        %v1029 = vpop.trf.xlu0
        %v1030 = vpop.trf.xlu0
        %v1031 = vpop.trf.xlu0
        %v1032 = vpop.trf.xlu0
        %v1033 = vpop.trf.xlu0
        %v1034 = vpop.trf.xlu0
        %1035 = vxpose.xlu0.b32.start [1/16] %v428, 128
        %1036 = vxpose.xlu0.b32.cont [2/16] %v432, 128
        %1037 = vxpose.xlu0.b32.cont [3/16] %v436, 128
        %1038 = vxpose.xlu0.b32.cont [4/16] %v440, 128
        %1039 = vxpose.xlu0.b32.cont [5/16] %v444, 128
        %1040 = vxpose.xlu0.b32.cont [6/16] %v448, 128
        %1041 = vxpose.xlu0.b32.cont [7/16] %v452, 128
        %1042 = vxpose.xlu0.b32.cont [8/16] %v456, 128
        %1043 = vxpose.xlu0.b32.cont [9/16] %v460, 128
        %1044 = vxpose.xlu0.b32.cont [10/16] %v464, 128
        %1045 = vxpose.xlu0.b32.cont [11/16] %v468, 128
        %1046 = vxpose.xlu0.b32.cont [12/16] %v472, 128
        %1047 = vxpose.xlu0.b32.cont [13/16] %v476, 128
        %1048 = vxpose.xlu0.b32.cont [14/16] %v480, 128
        %1049 = vxpose.xlu0.b32.cont [15/16] %v484, 128
        %1050 = vxpose.xlu0.b32.end [16/16] %v488, 128
        %v1051 = vpop.trf.xlu0
        %v1052 = vpop.trf.xlu0
        %v1053 = vpop.trf.xlu0
        %v1054 = vpop.trf.xlu0
        %v1055 = vpop.trf.xlu0
        %v1056 = vpop.trf.xlu0
        %v1057 = vpop.trf.xlu0
        %v1058 = vpop.trf.xlu0
        %v1059 = vpop.trf.xlu0
        %v1060 = vpop.trf.xlu0
        %v1061 = vpop.trf.xlu0
        %v1062 = vpop.trf.xlu0
        %v1063 = vpop.trf.xlu0
        %v1064 = vpop.trf.xlu0
        %v1065 = vpop.trf.xlu0
        %v1066 = vpop.trf.xlu0
        %1067 = vxpose.xlu0.b32.start [1/16] %v429, 128
        %1068 = vxpose.xlu0.b32.cont [2/16] %v433, 128
        %1069 = vxpose.xlu0.b32.cont [3/16] %v437, 128
        %1070 = vxpose.xlu0.b32.cont [4/16] %v441, 128
        %1071 = vxpose.xlu0.b32.cont [5/16] %v445, 128
        %1072 = vxpose.xlu0.b32.cont [6/16] %v449, 128
        %1073 = vxpose.xlu0.b32.cont [7/16] %v453, 128
        %1074 = vxpose.xlu0.b32.cont [8/16] %v457, 128
        %1075 = vxpose.xlu0.b32.cont [9/16] %v461, 128
        %1076 = vxpose.xlu0.b32.cont [10/16] %v465, 128
        %1077 = vxpose.xlu0.b32.cont [11/16] %v469, 128
        %1078 = vxpose.xlu0.b32.cont [12/16] %v473, 128
        %1079 = vxpose.xlu0.b32.cont [13/16] %v477, 128
        %1080 = vxpose.xlu0.b32.cont [14/16] %v481, 128
        %1081 = vxpose.xlu0.b32.cont [15/16] %v485, 128
        %1082 = vxpose.xlu0.b32.end [16/16] %v489, 128
        %v1083 = vpop.trf.xlu0
        %v1084 = vpop.trf.xlu0
        %v1085 = vpop.trf.xlu0
        %v1086 = vpop.trf.xlu0
        %v1087 = vpop.trf.xlu0
        %v1088 = vpop.trf.xlu0
        %v1089 = vpop.trf.xlu0
        %v1090 = vpop.trf.xlu0
        %v1091 = vpop.trf.xlu0
        %v1092 = vpop.trf.xlu0
        %v1093 = vpop.trf.xlu0
        %v1094 = vpop.trf.xlu0
        %v1095 = vpop.trf.xlu0
        %v1096 = vpop.trf.xlu0
        %v1097 = vpop.trf.xlu0
        %v1098 = vpop.trf.xlu0
        %1099 = vxpose.xlu0.b32.start [1/16] %v430, 128
        %1100 = vxpose.xlu0.b32.cont [2/16] %v434, 128
        %1101 = vxpose.xlu0.b32.cont [3/16] %v438, 128
        %1102 = vxpose.xlu0.b32.cont [4/16] %v442, 128
        %1103 = vxpose.xlu0.b32.cont [5/16] %v446, 128
        %1104 = vxpose.xlu0.b32.cont [6/16] %v450, 128
        %1105 = vxpose.xlu0.b32.cont [7/16] %v454, 128
        %1106 = vxpose.xlu0.b32.cont [8/16] %v458, 128
        %1107 = vxpose.xlu0.b32.cont [9/16] %v462, 128
        %1108 = vxpose.xlu0.b32.cont [10/16] %v466, 128
        %1109 = vxpose.xlu0.b32.cont [11/16] %v470, 128
        %1110 = vxpose.xlu0.b32.cont [12/16] %v474, 128
        %1111 = vxpose.xlu0.b32.cont [13/16] %v478, 128
        %1112 = vxpose.xlu0.b32.cont [14/16] %v482, 128
        %1113 = vxpose.xlu0.b32.cont [15/16] %v486, 128
        %1114 = vxpose.xlu0.b32.end [16/16] %v490, 128
        %v1115 = vpop.trf.xlu0
        %v1116 = vpop.trf.xlu0
        %v1117 = vpop.trf.xlu0
        %v1118 = vpop.trf.xlu0
        %v1119 = vpop.trf.xlu0
        %v1120 = vpop.trf.xlu0
        %v1121 = vpop.trf.xlu0
        %v1122 = vpop.trf.xlu0
        %v1123 = vpop.trf.xlu0
        %v1124 = vpop.trf.xlu0
        %v1125 = vpop.trf.xlu0
        %v1126 = vpop.trf.xlu0
        %v1127 = vpop.trf.xlu0
        %v1128 = vpop.trf.xlu0
        %v1129 = vpop.trf.xlu0
        %v1130 = vpop.trf.xlu0
        %1131 = vst [vmem:[%s166] sm:$0xff] %v507
        %1132 = vst [vmem:[%s166 + $0x8] sm:$0xff] %v635
        %1133 = vst [vmem:[%s166 + $0x10] sm:$0xff] %v763
        %1134 = vst [vmem:[%s166 + $0x18] sm:$0xff] %v891
        %1135 = vst [vmem:[%s166 + $0x20] sm:$0xff] %v1019
        %1136 = vst [vmem:[%s166 + $0x28] sm:$0xff] %v508
        %1137 = vst [vmem:[%s166 + $0x30] sm:$0xff] %v636
        %1138 = vst [vmem:[%s166 + $0x38] sm:$0xff] %v764
        %1139 = vst [vmem:[%s166 + $0x40] sm:$0xff] %v892
        %1140 = vst [vmem:[%s166 + $0x48] sm:$0xff] %v1020
        %1141 = vst [vmem:[%s166 + $0x50] sm:$0xff] %v509
        %1142 = vst [vmem:[%s166 + $0x58] sm:$0xff] %v637
        %1143 = vst [vmem:[%s166 + $0x60] sm:$0xff] %v765
        %1144 = vst [vmem:[%s166 + $0x68] sm:$0xff] %v893
        %1145 = vst [vmem:[%s166 + $0x70] sm:$0xff] %v1021
        %1146 = vst [vmem:[%s166 + $0x78] sm:$0xff] %v510
        %1147 = vst [vmem:[%s166 + $0x80] sm:$0xff] %v638
        %1148 = vst [vmem:[%s166 + $0x88] sm:$0xff] %v766
        %1149 = vst [vmem:[%s166 + $0x90] sm:$0xff] %v894
        %1150 = vst [vmem:[%s166 + $0x98] sm:$0xff] %v1022
        %1151 = vst [vmem:[%s166 + $0xa0] sm:$0xff] %v511
        %1152 = vst [vmem:[%s166 + $0xa8] sm:$0xff] %v639
        %1153 = vst [vmem:[%s166 + $0xb0] sm:$0xff] %v767
        %1154 = vst [vmem:[%s166 + $0xb8] sm:$0xff] %v895
        %1155 = vst [vmem:[%s166 + $0xc0] sm:$0xff] %v1023
        %1156 = vst [vmem:[%s166 + $0xc8] sm:$0xff] %v512
        %1157 = vst [vmem:[%s166 + $0xd0] sm:$0xff] %v640
        %1158 = vst [vmem:[%s166 + $0xd8] sm:$0xff] %v768
        %1159 = vst [vmem:[%s166 + $0xe0] sm:$0xff] %v896
        %1160 = vst [vmem:[%s166 + $0xe8] sm:$0xff] %v1024
        %1161 = vst [vmem:[%s166 + $0xf0] sm:$0xff] %v513
        %1162 = vst [vmem:[%s166 + $0xf8] sm:$0xff] %v641
        %1163 = vst [vmem:[%s166 + $0x100] sm:$0xff] %v769
        %1164 = vst [vmem:[%s166 + $0x108] sm:$0xff] %v897
        %1165 = vst [vmem:[%s166 + $0x110] sm:$0xff] %v1025
        %1166 = vst [vmem:[%s166 + $0x118] sm:$0xff] %v514
        %1167 = vst [vmem:[%s166 + $0x120] sm:$0xff] %v642
        %1168 = vst [vmem:[%s166 + $0x128] sm:$0xff] %v770
        %1169 = vst [vmem:[%s166 + $0x130] sm:$0xff] %v898
        %1170 = vst [vmem:[%s166 + $0x138] sm:$0xff] %v1026
        %1171 = vst [vmem:[%s166 + $0x140] sm:$0xff] %v515
        %1172 = vst [vmem:[%s166 + $0x148] sm:$0xff] %v643
        %1173 = vst [vmem:[%s166 + $0x150] sm:$0xff] %v771
        %1174 = vst [vmem:[%s166 + $0x158] sm:$0xff] %v899
        %1175 = vst [vmem:[%s166 + $0x160] sm:$0xff] %v1027
        %1176 = vst [vmem:[%s166 + $0x168] sm:$0xff] %v516
        %1177 = vst [vmem:[%s166 + $0x170] sm:$0xff] %v644
        %1178 = vst [vmem:[%s166 + $0x178] sm:$0xff] %v772
        %1179 = vst [vmem:[%s166 + $0x180] sm:$0xff] %v900
        %1180 = vst [vmem:[%s166 + $0x188] sm:$0xff] %v1028
        %1181 = vst [vmem:[%s166 + $0x190] sm:$0xff] %v517
        %1182 = vst [vmem:[%s166 + $0x198] sm:$0xff] %v645
        %1183 = vst [vmem:[%s166 + $0x1a0] sm:$0xff] %v773
        %1184 = vst [vmem:[%s166 + $0x1a8] sm:$0xff] %v901
        %1185 = vst [vmem:[%s166 + $0x1b0] sm:$0xff] %v1029
        %1186 = vst [vmem:[%s166 + $0x1b8] sm:$0xff] %v518
        %1187 = vst [vmem:[%s166 + $0x1c0] sm:$0xff] %v646
        %1188 = vst [vmem:[%s166 + $0x1c8] sm:$0xff] %v774
        %1189 = vst [vmem:[%s166 + $0x1d0] sm:$0xff] %v902
        %1190 = vst [vmem:[%s166 + $0x1d8] sm:$0xff] %v1030
        %1191 = vst [vmem:[%s166 + $0x1e0] sm:$0xff] %v519
        %1192 = vst [vmem:[%s166 + $0x1e8] sm:$0xff] %v647
        %1193 = vst [vmem:[%s166 + $0x1f0] sm:$0xff] %v775
        %1194 = vst [vmem:[%s166 + $0x1f8] sm:$0xff] %v903
        %1195 = vst [vmem:[%s166 + $0x200] sm:$0xff] %v1031
        %1196 = vst [vmem:[%s166 + $0x208] sm:$0xff] %v520
        %1197 = vst [vmem:[%s166 + $0x210] sm:$0xff] %v648
        %1198 = vst [vmem:[%s166 + $0x218] sm:$0xff] %v776
        %1199 = vst [vmem:[%s166 + $0x220] sm:$0xff] %v904
        %1200 = vst [vmem:[%s166 + $0x228] sm:$0xff] %v1032
        %1201 = vst [vmem:[%s166 + $0x230] sm:$0xff] %v521
        %1202 = vst [vmem:[%s166 + $0x238] sm:$0xff] %v649
        %1203 = vst [vmem:[%s166 + $0x240] sm:$0xff] %v777
        %1204 = vst [vmem:[%s166 + $0x248] sm:$0xff] %v905
        %1205 = vst [vmem:[%s166 + $0x250] sm:$0xff] %v1033
        %1206 = vst [vmem:[%s166 + $0x258] sm:$0xff] %v522
        %1207 = vst [vmem:[%s166 + $0x260] sm:$0xff] %v650
        %1208 = vst [vmem:[%s166 + $0x268] sm:$0xff] %v778
        %1209 = vst [vmem:[%s166 + $0x270] sm:$0xff] %v906
        %1210 = vst [vmem:[%s166 + $0x278] sm:$0xff] %v1034
        %1211 = vst [vmem:[%s166 + $0x280] sm:$0xff] %v539
        %1212 = vst [vmem:[%s166 + $0x288] sm:$0xff] %v667
        %1213 = vst [vmem:[%s166 + $0x290] sm:$0xff] %v795
        %1214 = vst [vmem:[%s166 + $0x298] sm:$0xff] %v923
        %1215 = vst [vmem:[%s166 + $0x2a0] sm:$0xff] %v1051
        %1216 = vst [vmem:[%s166 + $0x2a8] sm:$0xff] %v540
        %1217 = vst [vmem:[%s166 + $0x2b0] sm:$0xff] %v668
        %1218 = vst [vmem:[%s166 + $0x2b8] sm:$0xff] %v796
        %1219 = vst [vmem:[%s166 + $0x2c0] sm:$0xff] %v924
        %1220 = vst [vmem:[%s166 + $0x2c8] sm:$0xff] %v1052
        %1221 = vst [vmem:[%s166 + $0x2d0] sm:$0xff] %v541
        %1222 = vst [vmem:[%s166 + $0x2d8] sm:$0xff] %v669
        %1223 = vst [vmem:[%s166 + $0x2e0] sm:$0xff] %v797
        %1224 = vst [vmem:[%s166 + $0x2e8] sm:$0xff] %v925
        %1225 = vst [vmem:[%s166 + $0x2f0] sm:$0xff] %v1053
        %1226 = vst [vmem:[%s166 + $0x2f8] sm:$0xff] %v542
        %1227 = vst [vmem:[%s166 + $0x300] sm:$0xff] %v670
        %1228 = vst [vmem:[%s166 + $0x308] sm:$0xff] %v798
        %1229 = vst [vmem:[%s166 + $0x310] sm:$0xff] %v926
        %1230 = vst [vmem:[%s166 + $0x318] sm:$0xff] %v1054
        %1231 = vst [vmem:[%s166 + $0x320] sm:$0xff] %v543
        %1232 = vst [vmem:[%s166 + $0x328] sm:$0xff] %v671
        %1233 = vst [vmem:[%s166 + $0x330] sm:$0xff] %v799
        %1234 = vst [vmem:[%s166 + $0x338] sm:$0xff] %v927
        %1235 = vst [vmem:[%s166 + $0x340] sm:$0xff] %v1055
        %1236 = vst [vmem:[%s166 + $0x348] sm:$0xff] %v544
        %1237 = vst [vmem:[%s166 + $0x350] sm:$0xff] %v672
        %1238 = vst [vmem:[%s166 + $0x358] sm:$0xff] %v800
        %1239 = vst [vmem:[%s166 + $0x360] sm:$0xff] %v928
        %1240 = vst [vmem:[%s166 + $0x368] sm:$0xff] %v1056
        %1241 = vst [vmem:[%s166 + $0x370] sm:$0xff] %v545
        %1242 = vst [vmem:[%s166 + $0x378] sm:$0xff] %v673
        %1243 = vst [vmem:[%s166 + $0x380] sm:$0xff] %v801
        %1244 = vst [vmem:[%s166 + $0x388] sm:$0xff] %v929
        %1245 = vst [vmem:[%s166 + $0x390] sm:$0xff] %v1057
        %1246 = vst [vmem:[%s166 + $0x398] sm:$0xff] %v546
        %1247 = vst [vmem:[%s166 + $0x3a0] sm:$0xff] %v674
        %1248 = vst [vmem:[%s166 + $0x3a8] sm:$0xff] %v802
        %1249 = vst [vmem:[%s166 + $0x3b0] sm:$0xff] %v930
        %1250 = vst [vmem:[%s166 + $0x3b8] sm:$0xff] %v1058
        %1251 = vst [vmem:[%s166 + $0x3c0] sm:$0xff] %v547
        %1252 = vst [vmem:[%s166 + $0x3c8] sm:$0xff] %v675
        %1253 = vst [vmem:[%s166 + $0x3d0] sm:$0xff] %v803
        %1254 = vst [vmem:[%s166 + $0x3d8] sm:$0xff] %v931
        %1255 = vst [vmem:[%s166 + $0x3e0] sm:$0xff] %v1059
        %1256 = vst [vmem:[%s166 + $0x3e8] sm:$0xff] %v548
        %1257 = vst [vmem:[%s166 + $0x3f0] sm:$0xff] %v676
        %1258 = vst [vmem:[%s166 + $0x3f8] sm:$0xff] %v804
        %1259 = vst [vmem:[%s166 + $0x400] sm:$0xff] %v932
        %1260 = vst [vmem:[%s166 + $0x408] sm:$0xff] %v1060
        %1261 = vst [vmem:[%s166 + $0x410] sm:$0xff] %v549
        %1262 = vst [vmem:[%s166 + $0x418] sm:$0xff] %v677
        %1263 = vst [vmem:[%s166 + $0x420] sm:$0xff] %v805
        %1264 = vst [vmem:[%s166 + $0x428] sm:$0xff] %v933
        %1265 = vst [vmem:[%s166 + $0x430] sm:$0xff] %v1061
        %1266 = vst [vmem:[%s166 + $0x438] sm:$0xff] %v550
        %1267 = vst [vmem:[%s166 + $0x440] sm:$0xff] %v678
        %1268 = vst [vmem:[%s166 + $0x448] sm:$0xff] %v806
        %1269 = vst [vmem:[%s166 + $0x450] sm:$0xff] %v934
        %1270 = vst [vmem:[%s166 + $0x458] sm:$0xff] %v1062
        %1271 = vst [vmem:[%s166 + $0x460] sm:$0xff] %v551
        %1272 = vst [vmem:[%s166 + $0x468] sm:$0xff] %v679
        %1273 = vst [vmem:[%s166 + $0x470] sm:$0xff] %v807
        %1274 = vst [vmem:[%s166 + $0x478] sm:$0xff] %v935
        %1275 = vst [vmem:[%s166 + $0x480] sm:$0xff] %v1063
        %1276 = vst [vmem:[%s166 + $0x488] sm:$0xff] %v552
        %1277 = vst [vmem:[%s166 + $0x490] sm:$0xff] %v680
        %1278 = vst [vmem:[%s166 + $0x498] sm:$0xff] %v808
        %1279 = vst [vmem:[%s166 + $0x4a0] sm:$0xff] %v936
        %1280 = vst [vmem:[%s166 + $0x4a8] sm:$0xff] %v1064
        %1281 = vst [vmem:[%s166 + $0x4b0] sm:$0xff] %v553
        %1282 = vst [vmem:[%s166 + $0x4b8] sm:$0xff] %v681
        %1283 = vst [vmem:[%s166 + $0x4c0] sm:$0xff] %v809
        %1284 = vst [vmem:[%s166 + $0x4c8] sm:$0xff] %v937
        %1285 = vst [vmem:[%s166 + $0x4d0] sm:$0xff] %v1065
        %1286 = vst [vmem:[%s166 + $0x4d8] sm:$0xff] %v554
        %1287 = vst [vmem:[%s166 + $0x4e0] sm:$0xff] %v682
        %1288 = vst [vmem:[%s166 + $0x4e8] sm:$0xff] %v810
        %1289 = vst [vmem:[%s166 + $0x4f0] sm:$0xff] %v938
        %1290 = vst [vmem:[%s166 + $0x4f8] sm:$0xff] %v1066
        %1291 = vst [vmem:[%s166 + $0x500] sm:$0xff] %v571
        %1292 = vst [vmem:[%s166 + $0x508] sm:$0xff] %v699
        %1293 = vst [vmem:[%s166 + $0x510] sm:$0xff] %v827
        %1294 = vst [vmem:[%s166 + $0x518] sm:$0xff] %v955
        %1295 = vst [vmem:[%s166 + $0x520] sm:$0xff] %v1083
        %1296 = vst [vmem:[%s166 + $0x528] sm:$0xff] %v572
        %1297 = vst [vmem:[%s166 + $0x530] sm:$0xff] %v700
        %1298 = vst [vmem:[%s166 + $0x538] sm:$0xff] %v828
        %1299 = vst [vmem:[%s166 + $0x540] sm:$0xff] %v956
        %1300 = vst [vmem:[%s166 + $0x548] sm:$0xff] %v1084
        %1301 = vst [vmem:[%s166 + $0x550] sm:$0xff] %v573
        %1302 = vst [vmem:[%s166 + $0x558] sm:$0xff] %v701
        %1303 = vst [vmem:[%s166 + $0x560] sm:$0xff] %v829
        %1304 = vst [vmem:[%s166 + $0x568] sm:$0xff] %v957
        %1305 = vst [vmem:[%s166 + $0x570] sm:$0xff] %v1085
        %1306 = vst [vmem:[%s166 + $0x578] sm:$0xff] %v574
        %1307 = vst [vmem:[%s166 + $0x580] sm:$0xff] %v702
        %1308 = vst [vmem:[%s166 + $0x588] sm:$0xff] %v830
        %1309 = vst [vmem:[%s166 + $0x590] sm:$0xff] %v958
        %1310 = vst [vmem:[%s166 + $0x598] sm:$0xff] %v1086
        %1311 = vst [vmem:[%s166 + $0x5a0] sm:$0xff] %v575
        %1312 = vst [vmem:[%s166 + $0x5a8] sm:$0xff] %v703
        %1313 = vst [vmem:[%s166 + $0x5b0] sm:$0xff] %v831
        %1314 = vst [vmem:[%s166 + $0x5b8] sm:$0xff] %v959
        %1315 = vst [vmem:[%s166 + $0x5c0] sm:$0xff] %v1087
        %1316 = vst [vmem:[%s166 + $0x5c8] sm:$0xff] %v576
        %1317 = vst [vmem:[%s166 + $0x5d0] sm:$0xff] %v704
        %1318 = vst [vmem:[%s166 + $0x5d8] sm:$0xff] %v832
        %1319 = vst [vmem:[%s166 + $0x5e0] sm:$0xff] %v960
        %1320 = vst [vmem:[%s166 + $0x5e8] sm:$0xff] %v1088
        %1321 = vst [vmem:[%s166 + $0x5f0] sm:$0xff] %v577
        %1322 = vst [vmem:[%s166 + $0x5f8] sm:$0xff] %v705
        %1323 = vst [vmem:[%s166 + $0x600] sm:$0xff] %v833
        %1324 = vst [vmem:[%s166 + $0x608] sm:$0xff] %v961
        %1325 = vst [vmem:[%s166 + $0x610] sm:$0xff] %v1089
        %1326 = vst [vmem:[%s166 + $0x618] sm:$0xff] %v578
        %1327 = vst [vmem:[%s166 + $0x620] sm:$0xff] %v706
        %1328 = vst [vmem:[%s166 + $0x628] sm:$0xff] %v834
        %1329 = vst [vmem:[%s166 + $0x630] sm:$0xff] %v962
        %1330 = vst [vmem:[%s166 + $0x638] sm:$0xff] %v1090
        %1331 = vst [vmem:[%s166 + $0x640] sm:$0xff] %v579
        %1332 = vst [vmem:[%s166 + $0x648] sm:$0xff] %v707
        %1333 = vst [vmem:[%s166 + $0x650] sm:$0xff] %v835
        %1334 = vst [vmem:[%s166 + $0x658] sm:$0xff] %v963
        %1335 = vst [vmem:[%s166 + $0x660] sm:$0xff] %v1091
        %1336 = vst [vmem:[%s166 + $0x668] sm:$0xff] %v580
        %1337 = vst [vmem:[%s166 + $0x670] sm:$0xff] %v708
        %1338 = vst [vmem:[%s166 + $0x678] sm:$0xff] %v836
        %1339 = vst [vmem:[%s166 + $0x680] sm:$0xff] %v964
        %1340 = vst [vmem:[%s166 + $0x688] sm:$0xff] %v1092
        %1341 = vst [vmem:[%s166 + $0x690] sm:$0xff] %v581
        %1342 = vst [vmem:[%s166 + $0x698] sm:$0xff] %v709
        %1343 = vst [vmem:[%s166 + $0x6a0] sm:$0xff] %v837
        %1344 = vst [vmem:[%s166 + $0x6a8] sm:$0xff] %v965
        %1345 = vst [vmem:[%s166 + $0x6b0] sm:$0xff] %v1093
        %1346 = vst [vmem:[%s166 + $0x6b8] sm:$0xff] %v582
        %1347 = vst [vmem:[%s166 + $0x6c0] sm:$0xff] %v710
        %1348 = vst [vmem:[%s166 + $0x6c8] sm:$0xff] %v838
        %1349 = vst [vmem:[%s166 + $0x6d0] sm:$0xff] %v966
        %1350 = vst [vmem:[%s166 + $0x6d8] sm:$0xff] %v1094
        %1351 = vst [vmem:[%s166 + $0x6e0] sm:$0xff] %v583
        %1352 = vst [vmem:[%s166 + $0x6e8] sm:$0xff] %v711
        %1353 = vst [vmem:[%s166 + $0x6f0] sm:$0xff] %v839
        %1354 = vst [vmem:[%s166 + $0x6f8] sm:$0xff] %v967
        %1355 = vst [vmem:[%s166 + $0x700] sm:$0xff] %v1095
        %1356 = vst [vmem:[%s166 + $0x708] sm:$0xff] %v584
        %1357 = vst [vmem:[%s166 + $0x710] sm:$0xff] %v712
        %1358 = vst [vmem:[%s166 + $0x718] sm:$0xff] %v840
        %1359 = vst [vmem:[%s166 + $0x720] sm:$0xff] %v968
        %1360 = vst [vmem:[%s166 + $0x728] sm:$0xff] %v1096
        %1361 = vst [vmem:[%s166 + $0x730] sm:$0xff] %v585
        %1362 = vst [vmem:[%s166 + $0x738] sm:$0xff] %v713
        %1363 = vst [vmem:[%s166 + $0x740] sm:$0xff] %v841
        %1364 = vst [vmem:[%s166 + $0x748] sm:$0xff] %v969
        %1365 = vst [vmem:[%s166 + $0x750] sm:$0xff] %v1097
        %1366 = vst [vmem:[%s166 + $0x758] sm:$0xff] %v586
        %1367 = vst [vmem:[%s166 + $0x760] sm:$0xff] %v714
        %1368 = vst [vmem:[%s166 + $0x768] sm:$0xff] %v842
        %1369 = vst [vmem:[%s166 + $0x770] sm:$0xff] %v970
        %1370 = vst [vmem:[%s166 + $0x778] sm:$0xff] %v1098
        %1371 = vst [vmem:[%s166 + $0x780] sm:$0xff] %v603
        %1372 = vst [vmem:[%s166 + $0x788] sm:$0xff] %v731
        %1373 = vst [vmem:[%s166 + $0x790] sm:$0xff] %v859
        %1374 = vst [vmem:[%s166 + $0x798] sm:$0xff] %v987
        %1375 = vst [vmem:[%s166 + $0x7a0] sm:$0xff] %v1115
        %1376 = vst [vmem:[%s166 + $0x7a8] sm:$0xff] %v604
        %1377 = vst [vmem:[%s166 + $0x7b0] sm:$0xff] %v732
        %1378 = vst [vmem:[%s166 + $0x7b8] sm:$0xff] %v860
        %1379 = vst [vmem:[%s166 + $0x7c0] sm:$0xff] %v988
        %1380 = vst [vmem:[%s166 + $0x7c8] sm:$0xff] %v1116
        %1381 = vst [vmem:[%s166 + $0x7d0] sm:$0xff] %v605
        %1382 = vst [vmem:[%s166 + $0x7d8] sm:$0xff] %v733
        %1383 = vst [vmem:[%s166 + $0x7e0] sm:$0xff] %v861
        %1384 = vst [vmem:[%s166 + $0x7e8] sm:$0xff] %v989
        %1385 = vst [vmem:[%s166 + $0x7f0] sm:$0xff] %v1117
        %1386 = vst [vmem:[%s166 + $0x7f8] sm:$0xff] %v606
        %1387 = vst [vmem:[%s166 + $0x800] sm:$0xff] %v734
        %1388 = vst [vmem:[%s166 + $0x808] sm:$0xff] %v862
        %1389 = vst [vmem:[%s166 + $0x810] sm:$0xff] %v990
        %1390 = vst [vmem:[%s166 + $0x818] sm:$0xff] %v1118
        %1391 = vst [vmem:[%s166 + $0x820] sm:$0xff] %v607
        %1392 = vst [vmem:[%s166 + $0x828] sm:$0xff] %v735
        %1393 = vst [vmem:[%s166 + $0x830] sm:$0xff] %v863
        %1394 = vst [vmem:[%s166 + $0x838] sm:$0xff] %v991
        %1395 = vst [vmem:[%s166 + $0x840] sm:$0xff] %v1119
        %1396 = vst [vmem:[%s166 + $0x848] sm:$0xff] %v608
        %1397 = vst [vmem:[%s166 + $0x850] sm:$0xff] %v736
        %1398 = vst [vmem:[%s166 + $0x858] sm:$0xff] %v864
        %1399 = vst [vmem:[%s166 + $0x860] sm:$0xff] %v992
        %1400 = vst [vmem:[%s166 + $0x868] sm:$0xff] %v1120
        %1401 = vst [vmem:[%s166 + $0x870] sm:$0xff] %v609
        %1402 = vst [vmem:[%s166 + $0x878] sm:$0xff] %v737
        %1403 = vst [vmem:[%s166 + $0x880] sm:$0xff] %v865
        %1404 = vst [vmem:[%s166 + $0x888] sm:$0xff] %v993
        %1405 = vst [vmem:[%s166 + $0x890] sm:$0xff] %v1121
        %1406 = vst [vmem:[%s166 + $0x898] sm:$0xff] %v610
        %1407 = vst [vmem:[%s166 + $0x8a0] sm:$0xff] %v738
        %1408 = vst [vmem:[%s166 + $0x8a8] sm:$0xff] %v866
        %1409 = vst [vmem:[%s166 + $0x8b0] sm:$0xff] %v994
        %1410 = vst [vmem:[%s166 + $0x8b8] sm:$0xff] %v1122
        %1411 = vst [vmem:[%s166 + $0x8c0] sm:$0xff] %v611
        %1412 = vst [vmem:[%s166 + $0x8c8] sm:$0xff] %v739
        %1413 = vst [vmem:[%s166 + $0x8d0] sm:$0xff] %v867
        %1414 = vst [vmem:[%s166 + $0x8d8] sm:$0xff] %v995
        %1415 = vst [vmem:[%s166 + $0x8e0] sm:$0xff] %v1123
        %1416 = vst [vmem:[%s166 + $0x8e8] sm:$0xff] %v612
        %1417 = vst [vmem:[%s166 + $0x8f0] sm:$0xff] %v740
        %1418 = vst [vmem:[%s166 + $0x8f8] sm:$0xff] %v868
        %1419 = vst [vmem:[%s166 + $0x900] sm:$0xff] %v996
        %1420 = vst [vmem:[%s166 + $0x908] sm:$0xff] %v1124
        %1421 = vst [vmem:[%s166 + $0x910] sm:$0xff] %v613
        %1422 = vst [vmem:[%s166 + $0x918] sm:$0xff] %v741
        %1423 = vst [vmem:[%s166 + $0x920] sm:$0xff] %v869
        %1424 = vst [vmem:[%s166 + $0x928] sm:$0xff] %v997
        %1425 = vst [vmem:[%s166 + $0x930] sm:$0xff] %v1125
        %1426 = vst [vmem:[%s166 + $0x938] sm:$0xff] %v614
        %1427 = vst [vmem:[%s166 + $0x940] sm:$0xff] %v742
        %1428 = vst [vmem:[%s166 + $0x948] sm:$0xff] %v870
        %1429 = vst [vmem:[%s166 + $0x950] sm:$0xff] %v998
        %1430 = vst [vmem:[%s166 + $0x958] sm:$0xff] %v1126
        %1431 = vst [vmem:[%s166 + $0x960] sm:$0xff] %v615
        %1432 = vst [vmem:[%s166 + $0x968] sm:$0xff] %v743
        %1433 = vst [vmem:[%s166 + $0x970] sm:$0xff] %v871
        %1434 = vst [vmem:[%s166 + $0x978] sm:$0xff] %v999
        %1435 = vst [vmem:[%s166 + $0x980] sm:$0xff] %v1127
        %1436 = vst [vmem:[%s166 + $0x988] sm:$0xff] %v616
        %1437 = vst [vmem:[%s166 + $0x990] sm:$0xff] %v744
        %1438 = vst [vmem:[%s166 + $0x998] sm:$0xff] %v872
        %1439 = vst [vmem:[%s166 + $0x9a0] sm:$0xff] %v1000
        %1440 = vst [vmem:[%s166 + $0x9a8] sm:$0xff] %v1128
        %1441 = vst [vmem:[%s166 + $0x9b0] sm:$0xff] %v617
        %1442 = vst [vmem:[%s166 + $0x9b8] sm:$0xff] %v745
        %1443 = vst [vmem:[%s166 + $0x9c0] sm:$0xff] %v873
        %1444 = vst [vmem:[%s166 + $0x9c8] sm:$0xff] %v1001
        %1445 = vst [vmem:[%s166 + $0x9d0] sm:$0xff] %v1129
        %1446 = vst [vmem:[%s166 + $0x9d8] sm:$0xff] %v618
        %1447 = vst [vmem:[%s166 + $0x9e0] sm:$0xff] %v746
        %1448 = vst [vmem:[%s166 + $0x9e8] sm:$0xff] %v874
        %1449 = vst [vmem:[%s166 + $0x9f0] sm:$0xff] %v1002
        %1450 = vst [vmem:[%s166 + $0x9f8] sm:$0xff] %v1130
        %s1451 = sand.u32 %s79, 1
        %s1452 = scalar_lea.sflag [#allocation4], %s1451
        %s1453 = sand.u32 %s79, 1
        %s1454 = smul.addr %s1453, 2560
        %s1455 = scalar_lea.vmem [#allocation5], %s1454
        // Predicated region
        $region29: #{tpu_custom_call.1} parent=23 // pred_check
          %p1456 = pneg %p89
        $region30: #{tpu_custom_call.1} parent=23 // pred_check_branch
          %1458 = sbr.rel (%p1456) target = $region32
        $region31: #{tpu_custom_call.1} parent=23 // pred_region
          %s1459 = smul.u32 64, %s25
          %s1460 = smul.u32 5, %s24
          %s1462 = ssub.s32 40960, 40960
          %1463 = vsyncadd %s1452, %s1462
          %s1464 = smul.addr %s1459, 5
          %s1465 = sadd.s32 %s1460, %s1464
          %s1466 = smul.addr %s23, 320
          %s1467 = sadd.s32 %s1465, %s1466
          %s1468 = smul.addr %s1467, 128
          %s1469 = scalar_lea.hbm %s1, %s1468
          %s1470 = sshll.u32 %s1455, 4
          %s1471 = int_to_ptr.vmem [resolvable:$true] %s1470
          %1476 = dma.vmem_to_hbm [thread:$0]  %s1471, 40960, %s1469, %s1452, 640, 640, 40
        $region32: #{tpu_custom_call.1} parent=23 // pred_fallthru
          _
      $region24: #{tpu_custom_call.1} parent=5 // pred_fallthru
        _
      %p1477 = scmp.le.s32.totalorder 2, %s13
      // Predicated region
      $region33: #{tpu_custom_call.1} parent=5 // pred_check
        %p1478 = pneg %p1477
      $region34: #{tpu_custom_call.1} parent=5 // pred_check_branch
        %1480 = sbr.rel (%p1478) target = $region36
      $region35: #{tpu_custom_call.1} parent=5 // pred_region
        %s1481 = ssub.s32 %s13, 2
        // Predicated region
        $region37: #{tpu_custom_call.1} parent=35 // pred_check
          %p1482 = pneg %p95
        $region38: #{tpu_custom_call.1} parent=35 // pred_check_branch
          %1484 = sbr.rel (%p1482) target = $region40
        $region39: #{tpu_custom_call.1} parent=35 // pred_region
          %s1485 = sand.u32 %s80, 1
          %s1486 = scalar_lea.sflag [#allocation4], %s1485
          %s1487 = sand.u32 %s80, 1
          %s1488 = smul.addr %s1487, 2560
          %s1489 = scalar_lea.vmem [#allocation5], %s1488
          %1490 = dma.done %s1486, 40960
        $region40: #{tpu_custom_call.1} parent=35 // pred_fallthru
          _
      $region36: #{tpu_custom_call.1} parent=5 // pred_fallthru
        _
    $region6: #{tpu_custom_call.1} parent=1 // loop_footer
      %s17 = sadd.s32 1, %s13
    $region7: #{tpu_custom_call.1} parent=1 // loop_footer_branch
      %12 = sbr.rel target = $region3
    $region8: #{tpu_custom_call.1} parent=1 // loop_exit
      _
    %1491 = vsyncpa [#allocation3], 1
    %s1492 = scalar_lea.sflag [#allocation3], 1
    %1493 = vsyncpa %s1492, 1
    %1494 = vsyncpa [#allocation4], 1
    %s1495 = scalar_lea.sflag [#allocation4], 1
    %1496 = vsyncpa %s1495, 1

</llo_original>
